<compile_context>
chip_gen: v5e
topology: v5e:2x2
jax: 0.10.0
libtpu: 0.0.40
codegen_flags: <defaults>
</compile_context>

<pallas_src>
import functools

import numpy as np
import jax
import jax.numpy as jnp
from jax import lax
from jax.experimental import pallas as pl
from jax.experimental.pallas import tpu as pltpu

_BN_EPS = 1e-5
_INV_SQRT2 = 0.7071067811865476
_PAD = 128  # lane-aligned halo on each side of the flattened (H*W) image axis


def _erf(x):
    # Abramowitz & Stegun 7.1.26 polynomial erf, |err| < 1.5e-7, built only from
    # Mosaic-friendly ops (exp on the EUP). The divide lowers via an EUP
    # reciprocal + Newton step; pl.reciprocal(approx=True) would be cheaper but
    # its extra error is not worth risking against the 2e-4 parity check.
    a1, a2, a3, a4, a5 = (0.254829592, -0.284496736, 1.421413741,
                          -1.453152027, 1.061405429)
    p = 0.3275911
    ax = jnp.abs(x)
    t = 1.0 / (1.0 + p * ax)
    poly = ((((a5 * t + a4) * t + a3) * t + a2) * t + a1) * t
    y = 1.0 - poly * jnp.exp(-ax * ax)
    return jnp.where(x >= 0.0, y, -y)


def _gelu_exact(x):
    # nn.GELU() default (erf-based) GELU.
    return 0.5 * x * (1.0 + _erf(x * _INV_SQRT2))


def _unet_down_kernel(x_ref, w1_ref, g1_ref, bt1_ref, w2_ref, g2_ref, bt2_ref,
                      xmp_ref, xmn_ref, ptgt_ref, o_ref,
                      padx_ref, padh_ref, p1_ref, p2_ref, *, H, W):
    """Fused: conv3x3 -> BN -> GELU -> conv3x3 -> BN -> GELU -> MaxPool2d(2)."""
    del H  # spatial height only enters via the zero halo / pool targets
    N, Cin, HW = x_ref.shape
    Cout, HWq = o_ref.shape[1], o_ref.shape[2]
    M = N * HW
    inv_m = 1.0 / M
    taps = [(dy, dx) for dy in (-1, 0, 1) for dx in (-1, 0, 1)]

    mask_xp = xmp_ref[...]  # (1, HW) f32: 1 where reading x+1 stays in the row
    mask_xn = xmn_ref[...]  # (1, HW) f32: 1 where reading x-1 stays in the row

    def stage(pad_ref, imgs):
        # imgs: list of per-image (C, HW) values. Zero ONLY the two lane-aligned
        # halo blocks; write the interior once at a lane-aligned offset.
        n_, c_, _ = pad_ref.shape
        zeros = jnp.zeros((n_, c_, _PAD), jnp.float32)
        pad_ref[:, :, :_PAD] = zeros
        pad_ref[:, :, _PAD + HW:] = zeros
        for n in range(N):
            pad_ref[n, :, _PAD:_PAD + HW] = imgs[n]

    def im2col(pad_ref, p_ref, c):
        # p_ref[t*c + i, n*HW + m] = image[n, i, m + dy*W + dx] (0 outside the
        # image), so each conv becomes a single (Cout, 9c) @ (9c, N*HW) matmul.
        for n in range(N):
            for t, (dy, dx) in enumerate(taps):
                off = _PAD + dy * W + dx
                tap = pad_ref[n, :, off:off + HW]       # halo handles y bounds
                if dx == 1:
                    tap = tap * mask_xp                 # kill x = W-1 row wrap
                elif dx == -1:
                    tap = tap * mask_xn                 # kill x = 0 row wrap
                p_ref[t * c:(t + 1) * c, n * HW:(n + 1) * HW] = tap

    def bn_gelu(y, gamma, beta):
        # Training-mode BatchNorm folded to per-channel scale/shift; two-pass
        # (centered) variance; eps = 1e-5; biased variance like PyTorch.
        mu = jnp.sum(y, axis=1, keepdims=True) * inv_m
        d = y - mu
        var = jnp.sum(d * d, axis=1, keepdims=True) * inv_m
        scale = gamma * lax.rsqrt(var + _BN_EPS)
        return _gelu_exact(d * scale + beta)

    # ---- conv1 -> BN -> GELU (conv bias omitted: cancelled by batch-stat BN) --
    stage(padx_ref, [x_ref[n] for n in range(N)])
    im2col(padx_ref, p1_ref, Cin)
    h1 = bn_gelu(jnp.dot(w1_ref[...], p1_ref[...],
                         preferred_element_type=jnp.float32),
                 g1_ref[...], bt1_ref[...])                       # (Cout, N*HW)

    # ---- conv2 -> BN -> GELU --------------------------------------------------
    stage(padh_ref, [h1[:, n * HW:(n + 1) * HW] for n in range(N)])
    im2col(padh_ref, p2_ref, Cout)
    h2 = bn_gelu(jnp.dot(w2_ref[...], p2_ref[...],
                         preferred_element_type=jnp.float32),
                 g2_ref[...], bt2_ref[...])                       # (Cout, N*HW)

    # ---- MaxPool2d(2): restage h2 (halo already zero), 4-corner max via
    #      shifted halo loads, then gather the stride-2 window corners with a
    #      0/1 selection matmul (MXU is idle here; avoids strided gathers).
    for n in range(N):
        padh_ref[n, :, _PAD:_PAD + HW] = h2[:, n * HW:(n + 1) * HW]
    rows = lax.broadcasted_iota(jnp.int32, (HW, HWq), 0)
    sel = (rows == ptgt_ref[...]).astype(jnp.float32)             # (HW, HWq)
    for n in range(N):
        c00 = padh_ref[n, :, _PAD:_PAD + HW]
        c01 = padh_ref[n, :, _PAD + 1:_PAD + 1 + HW]
        c10 = padh_ref[n, :, _PAD + W:_PAD + W + HW]
        c11 = padh_ref[n, :, _PAD + W + 1:_PAD + W + 1 + HW]
        cmax = jnp.maximum(jnp.maximum(c00, c01), jnp.maximum(c10, c11))
        o_ref[n] = jnp.dot(cmax, sel, preferred_element_type=jnp.float32)


def unet_down_forward(x_nchw, params):
    """UnetDown.forward == conv1->BN->GELU->conv2->BN->GELU->MaxPool2d(2)."""
    x = x_nchw.astype(jnp.float32)
    N, Cin, H, W = x.shape
    Cout = params["w1"].shape[0]
    HW, Hq, Wq = H * W, H // 2, W // 2
    HWq = Hq * Wq

    # Layout plumbing is reshape-only (no NCHW<->NHWC transpose HBM passes):
    # the kernel works on flattened NCHW, (N, C, H*W), H*W on the lane axis.
    x_flat = x.reshape(N, Cin, HW)

    # PyTorch OIHW conv weights -> (Cout, 9*Cin) rows ordered to match the
    # kernel's tap order (t = (dy+1)*3 + (dx+1), channel-minor). These are
    # KB-sized parameters, not activation traffic. Conv biases are deliberately
    # NOT passed: training-mode BN cancels per-channel constants exactly.
    w1r = jnp.transpose(params["w1"], (0, 2, 3, 1)).reshape(Cout, 9 * Cin)
    w2r = jnp.transpose(params["w2"], (0, 2, 3, 1)).reshape(Cout, 9 * Cout)
    g1 = params["g1"].reshape(Cout, 1)
    bt1 = params["beta1"].reshape(Cout, 1)
    g2 = params["g2"].reshape(Cout, 1)
    bt2 = params["beta2"].reshape(Cout, 1)

    # Small static index helpers built host-side (avoids in-kernel int div/rem).
    xs = np.tile(np.arange(W, dtype=np.int32), H)                 # x coord per flat pixel
    xmask_p = (xs < W - 1).astype(np.float32).reshape(1, HW)      # may read x+1
    xmask_n = (xs >= 1).astype(np.float32).reshape(1, HW)         # may read x-1
    ptgt = (2 * W * np.arange(Hq, dtype=np.int32)[:, None]
            + 2 * np.arange(Wq, dtype=np.int32)[None, :]
            ).astype(np.int32).reshape(1, HWq)                    # pool window corners

    kernel = functools.partial(_unet_down_kernel, H=H, W=W)
    vmem = pl.BlockSpec(memory_space=pltpu.MemorySpace.VMEM)
    out = pl.pallas_call(
        kernel,
        out_shape=jax.ShapeDtypeStruct((N, Cout, HWq), jnp.float32),
        in_specs=[vmem] * 10,
        out_specs=vmem,
        scratch_shapes=[
            pltpu.VMEM((N, Cin, HW + 2 * _PAD), jnp.float32),     # haloed input
            pltpu.VMEM((N, Cout, HW + 2 * _PAD), jnp.float32),    # haloed h1 / h2
            pltpu.VMEM((9 * Cin, N * HW), jnp.float32),           # im2col patches (conv1)
            pltpu.VMEM((9 * Cout, N * HW), jnp.float32),          # im2col patches (conv2)
        ],
        compiler_params=pltpu.CompilerParams(
            vmem_limit_bytes=32 * 1024 * 1024),
    )(x_flat, w1r, g1, bt1, w2r, g2, bt2,
      jnp.asarray(xmask_p), jnp.asarray(xmask_n), jnp.asarray(ptgt))

    return out.reshape(N, Cout, Hq, Wq)                           # NCHW, reshape only


# ---------------- pure-JAX reference (for the parity check) ----------------
def _ref_conv_bn_gelu(x, w, b, g, beta):
    y = lax.conv_general_dilated(
        x, w, window_strides=(1, 1), padding=((1, 1), (1, 1)),
        dimension_numbers=("NCHW", "OIHW", "NCHW"),
        precision=lax.Precision.HIGHEST) + b.reshape(1, -1, 1, 1)
    mu = jnp.mean(y, axis=(0, 2, 3), keepdims=True)
    var = jnp.mean((y - mu) ** 2, axis=(0, 2, 3), keepdims=True)
    z = ((y - mu) * lax.rsqrt(var + _BN_EPS) * g.reshape(1, -1, 1, 1)
         + beta.reshape(1, -1, 1, 1))
    return jax.nn.gelu(z, approximate=False)


def ref_forward(x_nchw, params):
    h1 = _ref_conv_bn_gelu(x_nchw, params["w1"], params["b1"],
                           params["g1"], params["beta1"])
    h2 = _ref_conv_bn_gelu(h1, params["w2"], params["b2"],
                           params["g2"], params["beta2"])
    N, C, H, W = h2.shape
    return h2.reshape(N, C, H // 2, 2, W // 2, 2).max(axis=(3, 5))


if __name__ == "__main__":
    N, Cin, Cout, H, W = 2, 4, 8, 16, 16
    key = jax.random.PRNGKey(0)
    ks = jax.random.split(key, 9)
    # Deterministic synthetic parameters in PyTorch layout (OIHW conv weights,
    # per-channel conv bias and BN affine).
    params = {
        "w1":    0.2 * jax.random.normal(ks[0], (Cout, Cin, 3, 3), jnp.float32),
        "b1":    0.1 * jax.random.normal(ks[1], (Cout,), jnp.float32),
        "g1":    1.0 + 0.1 * jax.random.normal(ks[2], (Cout,), jnp.float32),
        "beta1": 0.1 * jax.random.normal(ks[3], (Cout,), jnp.float32),
        "w2":    0.2 * jax.random.normal(ks[4], (Cout, Cout, 3, 3), jnp.float32),
        "b2":    0.1 * jax.random.normal(ks[5], (Cout,), jnp.float32),
        "g2":    1.0 + 0.1 * jax.random.normal(ks[6], (Cout,), jnp.float32),
        "beta2": 0.1 * jax.random.normal(ks[7], (Cout,), jnp.float32),
    }
    x = jax.random.normal(ks[8], (N, Cin, H, W), jnp.float32)     # PyTorch NCHW input

    out = jax.block_until_ready(unet_down_forward(x, params))
    assert out.shape == (N, Cout, H // 2, W // 2), out.shape

    ref = jax.block_until_ready(ref_forward(x, params))
    err = float(jnp.max(jnp.abs(out - ref)))
    # The reference keeps the conv biases the kernel drops, so this also
    # validates the BN-cancellation claim. 2e-4 is ~250x tighter than before.
    assert err < 2e-4, f"max abs err too large: {err}"
    print("KERNEL_OK")
</pallas_src>

<mosaic_0001>
module attributes {stable_mosaic.version = 11 : i64} {
  func.func @_unet_down_kernel(%arg0: memref<2x4x256xf32, #tpu.memory_space<vmem>>, %arg1: memref<8x36xf32, #tpu.memory_space<vmem>>, %arg2: memref<8x1xf32, #tpu.memory_space<vmem>>, %arg3: memref<8x1xf32, #tpu.memory_space<vmem>>, %arg4: memref<8x72xf32, #tpu.memory_space<vmem>>, %arg5: memref<8x1xf32, #tpu.memory_space<vmem>>, %arg6: memref<8x1xf32, #tpu.memory_space<vmem>>, %arg7: memref<1x256xf32, #tpu.memory_space<vmem>>, %arg8: memref<1x256xf32, #tpu.memory_space<vmem>>, %arg9: memref<1x64xi32, #tpu.memory_space<vmem>>, %arg10: memref<2x8x64xf32, #tpu.memory_space<vmem>>, %arg11: memref<2x4x512xf32, #tpu.memory_space<vmem>>, %arg12: memref<2x8x512xf32, #tpu.memory_space<vmem>>, %arg13: memref<36x512xf32, #tpu.memory_space<vmem>>, %arg14: memref<72x512xf32, #tpu.memory_space<vmem>>) attributes {dimension_semantics = [], scalar_prefetch = 0 : i64, scratch_operands = 4 : i64, tpu.core_type = #tpu.core_type<tc>} {
    %c0 = arith.constant 0 : index
    %c0_0 = arith.constant 0 : index
    %0 = vector.load %arg7[%c0, %c0_0] : memref<1x256xf32, #tpu.memory_space<vmem>>, vector<1x256xf32>
    %c0_1 = arith.constant 0 : index
    %c0_2 = arith.constant 0 : index
    %1 = vector.load %arg8[%c0_1, %c0_2] : memref<1x256xf32, #tpu.memory_space<vmem>>, vector<1x256xf32>
    %c0_3 = arith.constant 0 : index
    %c0_4 = arith.constant 0 : index
    %c0_5 = arith.constant 0 : index
    %2 = vector.load %arg0[%c0_3, %c0_4, %c0_5] : memref<2x4x256xf32, #tpu.memory_space<vmem>>, vector<1x4x256xf32>
    %3 = vector.shape_cast %2 : vector<1x4x256xf32> to vector<4x256xf32>
    %c1 = arith.constant 1 : index
    %c0_6 = arith.constant 0 : index
    %c0_7 = arith.constant 0 : index
    %4 = vector.load %arg0[%c1, %c0_6, %c0_7] : memref<2x4x256xf32, #tpu.memory_space<vmem>>, vector<1x4x256xf32>
    %5 = vector.shape_cast %4 : vector<1x4x256xf32> to vector<4x256xf32>
    %cst = arith.constant 0.000000e+00 : f32
    %6 = vector.broadcast %cst : f32 to vector<2x4x128xf32>
    %c0_8 = arith.constant 0 : index
    %c0_9 = arith.constant 0 : index
    %c0_10 = arith.constant 0 : index
    %7 = vector.load %arg11[%c0_8, %c0_9, %c0_10] : memref<2x4x512xf32, #tpu.memory_space<vmem>>, vector<2x4x128xf32>
    tpu.vector_store %arg11[%c0_8, %c0_9, %c0_10], %6 {strides = array<i32>} : memref<2x4x512xf32, #tpu.memory_space<vmem>>, vector<2x4x128xf32>,
    %c0_11 = arith.constant 0 : index
    %c0_12 = arith.constant 0 : index
    %c384 = arith.constant 384 : index
    %8 = vector.load %arg11[%c0_11, %c0_12, %c384] : memref<2x4x512xf32, #tpu.memory_space<vmem>>, vector<2x4x128xf32>
    tpu.vector_store %arg11[%c0_11, %c0_12, %c384], %6 {strides = array<i32>} : memref<2x4x512xf32, #tpu.memory_space<vmem>>, vector<2x4x128xf32>,
    %c0_13 = arith.constant 0 : index
    %c0_14 = arith.constant 0 : index
    %c128 = arith.constant 128 : index
    %9 = vector.load %arg11[%c0_13, %c0_14, %c128] : memref<2x4x512xf32, #tpu.memory_space<vmem>>, vector<1x4x256xf32>
    %10 = vector.shape_cast %9 : vector<1x4x256xf32> to vector<4x256xf32>
    %11 = vector.shape_cast %3 : vector<4x256xf32> to vector<1x4x256xf32>
    tpu.vector_store %arg11[%c0_13, %c0_14, %c128], %11 {strides = array<i32>} : memref<2x4x512xf32, #tpu.memory_space<vmem>>, vector<1x4x256xf32>,
    %c1_15 = arith.constant 1 : index
    %c0_16 = arith.constant 0 : index
    %c128_17 = arith.constant 128 : index
    %12 = vector.load %arg11[%c1_15, %c0_16, %c128_17] : memref<2x4x512xf32, #tpu.memory_space<vmem>>, vector<1x4x256xf32>
    %13 = vector.shape_cast %12 : vector<1x4x256xf32> to vector<4x256xf32>
    %14 = vector.shape_cast %5 : vector<4x256xf32> to vector<1x4x256xf32>
    tpu.vector_store %arg11[%c1_15, %c0_16, %c128_17], %14 {strides = array<i32>} : memref<2x4x512xf32, #tpu.memory_space<vmem>>, vector<1x4x256xf32>,
    %c0_18 = arith.constant 0 : index
    %c0_19 = arith.constant 0 : index
    %c111 = arith.constant 111 : index
    %15 = vector.load %arg11[%c0_18, %c0_19, %c111] : memref<2x4x512xf32, #tpu.memory_space<vmem>>, vector<1x4x256xf32>
    %16 = vector.shape_cast %15 : vector<1x4x256xf32> to vector<4x256xf32>
    %17 = vector.broadcast %1 : vector<1x256xf32> to vector<4x256xf32>
    %18 = arith.mulf %16, %17 : vector<4x256xf32>
    %c0_20 = arith.constant 0 : index
    %c0_21 = arith.constant 0 : index
    %19 = vector.load %arg13[%c0_20, %c0_21] : memref<36x512xf32, #tpu.memory_space<vmem>>, vector<4x256xf32>
    tpu.vector_store %arg13[%c0_20, %c0_21], %18 {strides = array<i32>} : memref<36x512xf32, #tpu.memory_space<vmem>>, vector<4x256xf32>,
    %c0_22 = arith.constant 0 : index
    %c0_23 = arith.constant 0 : index
    %c112 = arith.constant 112 : index
    %20 = vector.load %arg11[%c0_22, %c0_23, %c112] : memref<2x4x512xf32, #tpu.memory_space<vmem>>, vector<1x4x256xf32>
    %21 = vector.shape_cast %20 : vector<1x4x256xf32> to vector<4x256xf32>
    %c4 = arith.constant 4 : index
    %c0_24 = arith.constant 0 : index
    %22 = vector.load %arg13[%c4, %c0_24] : memref<36x512xf32, #tpu.memory_space<vmem>>, vector<4x256xf32>
    tpu.vector_store %arg13[%c4, %c0_24], %21 {strides = array<i32>} : memref<36x512xf32, #tpu.memory_space<vmem>>, vector<4x256xf32>,
    %c0_25 = arith.constant 0 : index
    %c0_26 = arith.constant 0 : index
    %c113 = arith.constant 113 : index
    %23 = vector.load %arg11[%c0_25, %c0_26, %c113] : memref<2x4x512xf32, #tpu.memory_space<vmem>>, vector<1x4x256xf32>
    %24 = vector.shape_cast %23 : vector<1x4x256xf32> to vector<4x256xf32>
    %25 = vector.broadcast %0 : vector<1x256xf32> to vector<4x256xf32>
    %26 = arith.mulf %24, %25 : vector<4x256xf32>
    %c8 = arith.constant 8 : index
    %c0_27 = arith.constant 0 : index
    %27 = vector.load %arg13[%c8, %c0_27] : memref<36x512xf32, #tpu.memory_space<vmem>>, vector<4x256xf32>
    tpu.vector_store %arg13[%c8, %c0_27], %26 {strides = array<i32>} : memref<36x512xf32, #tpu.memory_space<vmem>>, vector<4x256xf32>,
    %c0_28 = arith.constant 0 : index
    %c0_29 = arith.constant 0 : index
    %c127 = arith.constant 127 : index
    %28 = vector.load %arg11[%c0_28, %c0_29, %c127] : memref<2x4x512xf32, #tpu.memory_space<vmem>>, vector<1x4x256xf32>
    %29 = vector.shape_cast %28 : vector<1x4x256xf32> to vector<4x256xf32>
    %30 = vector.broadcast %1 : vector<1x256xf32> to vector<4x256xf32>
    %31 = arith.mulf %29, %30 : vector<4x256xf32>
    %c12 = arith.constant 12 : index
    %c0_30 = arith.constant 0 : index
    %32 = vector.load %arg13[%c12, %c0_30] : memref<36x512xf32, #tpu.memory_space<vmem>>, vector<4x256xf32>
    tpu.vector_store %arg13[%c12, %c0_30], %31 {strides = array<i32>} : memref<36x512xf32, #tpu.memory_space<vmem>>, vector<4x256xf32>,
    %c0_31 = arith.constant 0 : index
    %c0_32 = arith.constant 0 : index
    %c128_33 = arith.constant 128 : index
    %33 = vector.load %arg11[%c0_31, %c0_32, %c128_33] : memref<2x4x512xf32, #tpu.memory_space<vmem>>, vector<1x4x256xf32>
    %34 = vector.shape_cast %33 : vector<1x4x256xf32> to vector<4x256xf32>
    %c16 = arith.constant 16 : index
    %c0_34 = arith.constant 0 : index
    %35 = vector.load %arg13[%c16, %c0_34] : memref<36x512xf32, #tpu.memory_space<vmem>>, vector<4x256xf32>
    tpu.vector_store %arg13[%c16, %c0_34], %34 {strides = array<i32>} : memref<36x512xf32, #tpu.memory_space<vmem>>, vector<4x256xf32>,
    %c0_35 = arith.constant 0 : index
    %c0_36 = arith.constant 0 : index
    %c129 = arith.constant 129 : index
    %36 = vector.load %arg11[%c0_35, %c0_36, %c129] : memref<2x4x512xf32, #tpu.memory_space<vmem>>, vector<1x4x256xf32>
    %37 = vector.shape_cast %36 : vector<1x4x256xf32> to vector<4x256xf32>
    %38 = vector.broadcast %0 : vector<1x256xf32> to vector<4x256xf32>
    %39 = arith.mulf %37, %38 : vector<4x256xf32>
    %c20 = arith.constant 20 : index
    %c0_37 = arith.constant 0 : index
    %40 = vector.load %arg13[%c20, %c0_37] : memref<36x512xf32, #tpu.memory_space<vmem>>, vector<4x256xf32>
    tpu.vector_store %arg13[%c20, %c0_37], %39 {strides = array<i32>} : memref<36x512xf32, #tpu.memory_space<vmem>>, vector<4x256xf32>,
    %c0_38 = arith.constant 0 : index
    %c0_39 = arith.constant 0 : index
    %c143 = arith.constant 143 : index
    %41 = vector.load %arg11[%c0_38, %c0_39, %c143] : memref<2x4x512xf32, #tpu.memory_space<vmem>>, vector<1x4x256xf32>
    %42 = vector.shape_cast %41 : vector<1x4x256xf32> to vector<4x256xf32>
    %43 = vector.broadcast %1 : vector<1x256xf32> to vector<4x256xf32>
    %44 = arith.mulf %42, %43 : vector<4x256xf32>
    %c24 = arith.constant 24 : index
    %c0_40 = arith.constant 0 : index
    %45 = vector.load %arg13[%c24, %c0_40] : memref<36x512xf32, #tpu.memory_space<vmem>>, vector<4x256xf32>
    tpu.vector_store %arg13[%c24, %c0_40], %44 {strides = array<i32>} : memref<36x512xf32, #tpu.memory_space<vmem>>, vector<4x256xf32>,
    %c0_41 = arith.constant 0 : index
    %c0_42 = arith.constant 0 : index
    %c144 = arith.constant 144 : index
    %46 = vector.load %arg11[%c0_41, %c0_42, %c144] : memref<2x4x512xf32, #tpu.memory_space<vmem>>, vector<1x4x256xf32>
    %47 = vector.shape_cast %46 : vector<1x4x256xf32> to vector<4x256xf32>
    %c28 = arith.constant 28 : index
    %c0_43 = arith.constant 0 : index
    %48 = vector.load %arg13[%c28, %c0_43] : memref<36x512xf32, #tpu.memory_space<vmem>>, vector<4x256xf32>
    tpu.vector_store %arg13[%c28, %c0_43], %47 {strides = array<i32>} : memref<36x512xf32, #tpu.memory_space<vmem>>, vector<4x256xf32>,
    %c0_44 = arith.constant 0 : index
    %c0_45 = arith.constant 0 : index
    %c145 = arith.constant 145 : index
    %49 = vector.load %arg11[%c0_44, %c0_45, %c145] : memref<2x4x512xf32, #tpu.memory_space<vmem>>, vector<1x4x256xf32>
    %50 = vector.shape_cast %49 : vector<1x4x256xf32> to vector<4x256xf32>
    %51 = vector.broadcast %0 : vector<1x256xf32> to vector<4x256xf32>
    %52 = arith.mulf %50, %51 : vector<4x256xf32>
    %c32 = arith.constant 32 : index
    %c0_46 = arith.constant 0 : index
    %53 = vector.load %arg13[%c32, %c0_46] : memref<36x512xf32, #tpu.memory_space<vmem>>, vector<4x256xf32>
    tpu.vector_store %arg13[%c32, %c0_46], %52 {strides = array<i32>} : memref<36x512xf32, #tpu.memory_space<vmem>>, vector<4x256xf32>,
    %c1_47 = arith.constant 1 : index
    %c0_48 = arith.constant 0 : index
    %c111_49 = arith.constant 111 : index
    %54 = vector.load %arg11[%c1_47, %c0_48, %c111_49] : memref<2x4x512xf32, #tpu.memory_space<vmem>>, vector<1x4x256xf32>
    %55 = vector.shape_cast %54 : vector<1x4x256xf32> to vector<4x256xf32>
    %56 = vector.broadcast %1 : vector<1x256xf32> to vector<4x256xf32>
    %57 = arith.mulf %55, %56 : vector<4x256xf32>
    %c0_50 = arith.constant 0 : index
    %c256 = arith.constant 256 : index
    %58 = vector.load %arg13[%c0_50, %c256] : memref<36x512xf32, #tpu.memory_space<vmem>>, vector<4x256xf32>
    tpu.vector_store %arg13[%c0_50, %c256], %57 {strides = array<i32>} : memref<36x512xf32, #tpu.memory_space<vmem>>, vector<4x256xf32>,
    %c1_51 = arith.constant 1 : index
    %c0_52 = arith.constant 0 : index
    %c112_53 = arith.constant 112 : index
    %59 = vector.load %arg11[%c1_51, %c0_52, %c112_53] : memref<2x4x512xf32, #tpu.memory_space<vmem>>, vector<1x4x256xf32>
    %60 = vector.shape_cast %59 : vector<1x4x256xf32> to vector<4x256xf32>
    %c4_54 = arith.constant 4 : index
    %c256_55 = arith.constant 256 : index
    %61 = vector.load %arg13[%c4_54, %c256_55] : memref<36x512xf32, #tpu.memory_space<vmem>>, vector<4x256xf32>
    tpu.vector_store %arg13[%c4_54, %c256_55], %60 {strides = array<i32>} : memref<36x512xf32, #tpu.memory_space<vmem>>, vector<4x256xf32>,
    %c1_56 = arith.constant 1 : index
    %c0_57 = arith.constant 0 : index
    %c113_58 = arith.constant 113 : index
    %62 = vector.load %arg11[%c1_56, %c0_57, %c113_58] : memref<2x4x512xf32, #tpu.memory_space<vmem>>, vector<1x4x256xf32>
    %63 = vector.shape_cast %62 : vector<1x4x256xf32> to vector<4x256xf32>
    %64 = vector.broadcast %0 : vector<1x256xf32> to vector<4x256xf32>
    %65 = arith.mulf %63, %64 : vector<4x256xf32>
    %c8_59 = arith.constant 8 : index
    %c256_60 = arith.constant 256 : index
    %66 = vector.load %arg13[%c8_59, %c256_60] : memref<36x512xf32, #tpu.memory_space<vmem>>, vector<4x256xf32>
    tpu.vector_store %arg13[%c8_59, %c256_60], %65 {strides = array<i32>} : memref<36x512xf32, #tpu.memory_space<vmem>>, vector<4x256xf32>,
    %c1_61 = arith.constant 1 : index
    %c0_62 = arith.constant 0 : index
    %c127_63 = arith.constant 127 : index
    %67 = vector.load %arg11[%c1_61, %c0_62, %c127_63] : memref<2x4x512xf32, #tpu.memory_space<vmem>>, vector<1x4x256xf32>
    %68 = vector.shape_cast %67 : vector<1x4x256xf32> to vector<4x256xf32>
    %69 = vector.broadcast %1 : vector<1x256xf32> to vector<4x256xf32>
    %70 = arith.mulf %68, %69 : vector<4x256xf32>
    %c12_64 = arith.constant 12 : index
    %c256_65 = arith.constant 256 : index
    %71 = vector.load %arg13[%c12_64, %c256_65] : memref<36x512xf32, #tpu.memory_space<vmem>>, vector<4x256xf32>
    tpu.vector_store %arg13[%c12_64, %c256_65], %70 {strides = array<i32>} : memref<36x512xf32, #tpu.memory_space<vmem>>, vector<4x256xf32>,
    %c1_66 = arith.constant 1 : index
    %c0_67 = arith.constant 0 : index
    %c128_68 = arith.constant 128 : index
    %72 = vector.load %arg11[%c1_66, %c0_67, %c128_68] : memref<2x4x512xf32, #tpu.memory_space<vmem>>, vector<1x4x256xf32>
    %73 = vector.shape_cast %72 : vector<1x4x256xf32> to vector<4x256xf32>
    %c16_69 = arith.constant 16 : index
    %c256_70 = arith.constant 256 : index
    %74 = vector.load %arg13[%c16_69, %c256_70] : memref<36x512xf32, #tpu.memory_space<vmem>>, vector<4x256xf32>
    tpu.vector_store %arg13[%c16_69, %c256_70], %73 {strides = array<i32>} : memref<36x512xf32, #tpu.memory_space<vmem>>, vector<4x256xf32>,
    %c1_71 = arith.constant 1 : index
    %c0_72 = arith.constant 0 : index
    %c129_73 = arith.constant 129 : index
    %75 = vector.load %arg11[%c1_71, %c0_72, %c129_73] : memref<2x4x512xf32, #tpu.memory_space<vmem>>, vector<1x4x256xf32>
    %76 = vector.shape_cast %75 : vector<1x4x256xf32> to vector<4x256xf32>
    %77 = vector.broadcast %0 : vector<1x256xf32> to vector<4x256xf32>
    %78 = arith.mulf %76, %77 : vector<4x256xf32>
    %c20_74 = arith.constant 20 : index
    %c256_75 = arith.constant 256 : index
    %79 = vector.load %arg13[%c20_74, %c256_75] : memref<36x512xf32, #tpu.memory_space<vmem>>, vector<4x256xf32>
    tpu.vector_store %arg13[%c20_74, %c256_75], %78 {strides = array<i32>} : memref<36x512xf32, #tpu.memory_space<vmem>>, vector<4x256xf32>,
    %c1_76 = arith.constant 1 : index
    %c0_77 = arith.constant 0 : index
    %c143_78 = arith.constant 143 : index
    %80 = vector.load %arg11[%c1_76, %c0_77, %c143_78] : memref<2x4x512xf32, #tpu.memory_space<vmem>>, vector<1x4x256xf32>
    %81 = vector.shape_cast %80 : vector<1x4x256xf32> to vector<4x256xf32>
    %82 = vector.broadcast %1 : vector<1x256xf32> to vector<4x256xf32>
    %83 = arith.mulf %81, %82 : vector<4x256xf32>
    %c24_79 = arith.constant 24 : index
    %c256_80 = arith.constant 256 : index
    %84 = vector.load %arg13[%c24_79, %c256_80] : memref<36x512xf32, #tpu.memory_space<vmem>>, vector<4x256xf32>
    tpu.vector_store %arg13[%c24_79, %c256_80], %83 {strides = array<i32>} : memref<36x512xf32, #tpu.memory_space<vmem>>, vector<4x256xf32>,
    %c1_81 = arith.constant 1 : index
    %c0_82 = arith.constant 0 : index
    %c144_83 = arith.constant 144 : index
    %85 = vector.load %arg11[%c1_81, %c0_82, %c144_83] : memref<2x4x512xf32, #tpu.memory_space<vmem>>, vector<1x4x256xf32>
    %86 = vector.shape_cast %85 : vector<1x4x256xf32> to vector<4x256xf32>
    %c28_84 = arith.constant 28 : index
    %c256_85 = arith.constant 256 : index
    %87 = vector.load %arg13[%c28_84, %c256_85] : memref<36x512xf32, #tpu.memory_space<vmem>>, vector<4x256xf32>
    tpu.vector_store %arg13[%c28_84, %c256_85], %86 {strides = array<i32>} : memref<36x512xf32, #tpu.memory_space<vmem>>, vector<4x256xf32>,
    %c1_86 = arith.constant 1 : index
    %c0_87 = arith.constant 0 : index
    %c145_88 = arith.constant 145 : index
    %88 = vector.load %arg11[%c1_86, %c0_87, %c145_88] : memref<2x4x512xf32, #tpu.memory_space<vmem>>, vector<1x4x256xf32>
    %89 = vector.shape_cast %88 : vector<1x4x256xf32> to vector<4x256xf32>
    %90 = vector.broadcast %0 : vector<1x256xf32> to vector<4x256xf32>
    %91 = arith.mulf %89, %90 : vector<4x256xf32>
    %c32_89 = arith.constant 32 : index
    %c256_90 = arith.constant 256 : index
    %92 = vector.load %arg13[%c32_89, %c256_90] : memref<36x512xf32, #tpu.memory_space<vmem>>, vector<4x256xf32>
    tpu.vector_store %arg13[%c32_89, %c256_90], %91 {strides = array<i32>} : memref<36x512xf32, #tpu.memory_space<vmem>>, vector<4x256xf32>,
    %c0_91 = arith.constant 0 : index
    %c0_92 = arith.constant 0 : index
    %93 = vector.load %arg1[%c0_91, %c0_92] : memref<8x36xf32, #tpu.memory_space<vmem>>, vector<8x36xf32>
    %c0_93 = arith.constant 0 : index
    %c0_94 = arith.constant 0 : index
    %94 = vector.load %arg13[%c0_93, %c0_94] : memref<36x512xf32, #tpu.memory_space<vmem>>, vector<36x512xf32>
    %cst_95 = arith.constant dense<0.000000e+00> : vector<8x512xf32>
    %95 = tpu.matmul %93, %94, %cst_95 {dimension_numbers = #tpu.dot_dimension_numbers<[1], [0], [0], [1], [0, 0, 1, 1], [], []>} : vector<8x36xf32>, vector<36x512xf32>, vector<8x512xf32> -> vector<8x512xf32>
    %c0_96 = arith.constant 0 : index
    %c0_97 = arith.constant 0 : index
    %96 = vector.load %arg2[%c0_96, %c0_97] : memref<8x1xf32, #tpu.memory_space<vmem>>, vector<8x1xf32>
    %c0_98 = arith.constant 0 : index
    %c0_99 = arith.constant 0 : index
    %97 = vector.load %arg3[%c0_98, %c0_99] : memref<8x1xf32, #tpu.memory_space<vmem>>, vector<8x1xf32>
    %cst_100 = arith.constant dense<0.000000e+00> : vector<8xf32>
    %98 = vector.multi_reduction <add>, %95, %cst_100 [1] : vector<8x512xf32> to vector<8xf32>
    %99 = vector.shape_cast %98 : vector<8xf32> to vector<8x1xf32>
    %cst_101 = arith.constant 0.001953125 : f32
    %100 = vector.broadcast %cst_101 : f32 to vector<8x1xf32>
    %101 = arith.mulf %99, %100 : vector<8x1xf32>
    %102 = vector.broadcast %101 : vector<8x1xf32> to vector<8x512xf32>
    %103 = arith.subf %95, %102 : vector<8x512xf32>
    %104 = arith.mulf %103, %103 : vector<8x512xf32>
    %cst_102 = arith.constant dense<0.000000e+00> : vector<8xf32>
    %105 = vector.multi_reduction <add>, %104, %cst_102 [1] : vector<8x512xf32> to vector<8xf32>
    %106 = vector.shape_cast %105 : vector<8xf32> to vector<8x1xf32>
    %cst_103 = arith.constant 0.001953125 : f32
    %107 = vector.broadcast %cst_103 : f32 to vector<8x1xf32>
    %108 = arith.mulf %106, %107 : vector<8x1xf32>
    %cst_104 = arith.constant 9.99999974E-6 : f32
    %109 = vector.broadcast %cst_104 : f32 to vector<8x1xf32>
    %110 = arith.addf %108, %109 : vector<8x1xf32>
    %111 = math.rsqrt %110 : vector<8x1xf32>
    %112 = arith.mulf %96, %111 : vector<8x1xf32>
    %113 = vector.broadcast %112 : vector<8x1xf32> to vector<8x512xf32>
    %114 = arith.mulf %103, %113 : vector<8x512xf32>
    %115 = vector.broadcast %97 : vector<8x1xf32> to vector<8x512xf32>
    %116 = arith.addf %114, %115 : vector<8x512xf32>
    %cst_105 = arith.constant 5.000000e-01 : f32
    %117 = vector.broadcast %cst_105 : f32 to vector<8x512xf32>
    %118 = arith.mulf %117, %116 : vector<8x512xf32>
    %cst_106 = arith.constant 0.707106769 : f32
    %119 = vector.broadcast %cst_106 : f32 to vector<8x512xf32>
    %120 = arith.mulf %116, %119 : vector<8x512xf32>
    %121 = math.absf %120 : vector<8x512xf32>
    %cst_107 = arith.constant 0.327591091 : f32
    %122 = vector.broadcast %cst_107 : f32 to vector<8x512xf32>
    %123 = arith.mulf %122, %121 : vector<8x512xf32>
    %cst_108 = arith.constant 1.000000e+00 : f32
    %124 = vector.broadcast %cst_108 : f32 to vector<8x512xf32>
    %125 = arith.addf %124, %123 : vector<8x512xf32>
    %cst_109 = arith.constant 1.000000e+00 : f32
    %126 = vector.broadcast %cst_109 : f32 to vector<8x512xf32>
    %127 = arith.divf %126, %125 : vector<8x512xf32>
    %cst_110 = arith.constant 1.06140542 : f32
    %128 = vector.broadcast %cst_110 : f32 to vector<8x512xf32>
    %129 = arith.mulf %128, %127 : vector<8x512xf32>
    %cst_111 = arith.constant -1.45315206 : f32
    %130 = vector.broadcast %cst_111 : f32 to vector<8x512xf32>
    %131 = arith.addf %129, %130 : vector<8x512xf32>
    %132 = arith.mulf %131, %127 : vector<8x512xf32>
    %cst_112 = arith.constant 1.42141378 : f32
    %133 = vector.broadcast %cst_112 : f32 to vector<8x512xf32>
    %134 = arith.addf %132, %133 : vector<8x512xf32>
    %135 = arith.mulf %134, %127 : vector<8x512xf32>
    %cst_113 = arith.constant -0.284496725 : f32
    %136 = vector.broadcast %cst_113 : f32 to vector<8x512xf32>
    %137 = arith.addf %135, %136 : vector<8x512xf32>
    %138 = arith.mulf %137, %127 : vector<8x512xf32>
    %cst_114 = arith.constant 0.254829586 : f32
    %139 = vector.broadcast %cst_114 : f32 to vector<8x512xf32>
    %140 = arith.addf %138, %139 : vector<8x512xf32>
    %141 = arith.mulf %140, %127 : vector<8x512xf32>
    %cst_115 = arith.constant 0.000000e+00 : f32
    %142 = vector.broadcast %cst_115 : f32 to vector<8x512xf32>
    %143 = arith.subf %142, %121 : vector<8x512xf32>
    %144 = arith.mulf %143, %121 : vector<8x512xf32>
    %145 = math.exp %144 : vector<8x512xf32>
    %146 = arith.mulf %141, %145 : vector<8x512xf32>
    %cst_116 = arith.constant 1.000000e+00 : f32
    %147 = vector.broadcast %cst_116 : f32 to vector<8x512xf32>
    %148 = arith.subf %147, %146 : vector<8x512xf32>
    %cst_117 = arith.constant 0.000000e+00 : f32
    %149 = vector.broadcast %cst_117 : f32 to vector<8x512xf32>
    %150 = arith.cmpf oge, %120, %149 : vector<8x512xf32>
    %cst_118 = arith.constant 0.000000e+00 : f32
    %151 = vector.broadcast %cst_118 : f32 to vector<8x512xf32>
    %152 = arith.subf %151, %148 : vector<8x512xf32>
    %153 = arith.select %150, %148, %152 : vector<8x512xi1>, vector<8x512xf32>
    %cst_119 = arith.constant 1.000000e+00 : f32
    %154 = vector.broadcast %cst_119 : f32 to vector<8x512xf32>
    %155 = arith.addf %154, %153 : vector<8x512xf32>
    %156 = arith.mulf %118, %155 : vector<8x512xf32>
    %157 = vector.extract_strided_slice %156 {offsets = [0, 0], sizes = [8, 256], strides = [1, 1]} : vector<8x512xf32> to vector<8x256xf32>
    %158 = vector.extract_strided_slice %156 {offsets = [0, 256], sizes = [8, 256], strides = [1, 1]} : vector<8x512xf32> to vector<8x256xf32>
    %cst_120 = arith.constant 0.000000e+00 : f32
    %159 = vector.broadcast %cst_120 : f32 to vector<2x8x128xf32>
    %c0_121 = arith.constant 0 : index
    %c0_122 = arith.constant 0 : index
    %c0_123 = arith.constant 0 : index
    %160 = vector.load %arg12[%c0_121, %c0_122, %c0_123] : memref<2x8x512xf32, #tpu.memory_space<vmem>>, vector<2x8x128xf32>
    tpu.vector_store %arg12[%c0_121, %c0_122, %c0_123], %159 {strides = array<i32>} : memref<2x8x512xf32, #tpu.memory_space<vmem>>, vector<2x8x128xf32>,
    %c0_124 = arith.constant 0 : index
    %c0_125 = arith.constant 0 : index
    %c384_126 = arith.constant 384 : index
    %161 = vector.load %arg12[%c0_124, %c0_125, %c384_126] : memref<2x8x512xf32, #tpu.memory_space<vmem>>, vector<2x8x128xf32>
    tpu.vector_store %arg12[%c0_124, %c0_125, %c384_126], %159 {strides = array<i32>} : memref<2x8x512xf32, #tpu.memory_space<vmem>>, vector<2x8x128xf32>,
    %c0_127 = arith.constant 0 : index
    %c0_128 = arith.constant 0 : index
    %c128_129 = arith.constant 128 : index
    %162 = vector.load %arg12[%c0_127, %c0_128, %c128_129] : memref<2x8x512xf32, #tpu.memory_space<vmem>>, vector<1x8x256xf32>
    %163 = vector.shape_cast %162 : vector<1x8x256xf32> to vector<8x256xf32>
    %164 = vector.shape_cast %157 : vector<8x256xf32> to vector<1x8x256xf32>
    tpu.vector_store %arg12[%c0_127, %c0_128, %c128_129], %164 {strides = array<i32>} : memref<2x8x512xf32, #tpu.memory_space<vmem>>, vector<1x8x256xf32>,
    %c1_130 = arith.constant 1 : index
    %c0_131 = arith.constant 0 : index
    %c128_132 = arith.constant 128 : index
    %165 = vector.load %arg12[%c1_130, %c0_131, %c128_132] : memref<2x8x512xf32, #tpu.memory_space<vmem>>, vector<1x8x256xf32>
    %166 = vector.shape_cast %165 : vector<1x8x256xf32> to vector<8x256xf32>
    %167 = vector.shape_cast %158 : vector<8x256xf32> to vector<1x8x256xf32>
    tpu.vector_store %arg12[%c1_130, %c0_131, %c128_132], %167 {strides = array<i32>} : memref<2x8x512xf32, #tpu.memory_space<vmem>>, vector<1x8x256xf32>,
    %c0_133 = arith.constant 0 : index
    %c0_134 = arith.constant 0 : index
    %c111_135 = arith.constant 111 : index
    %168 = vector.load %arg12[%c0_133, %c0_134, %c111_135] : memref<2x8x512xf32, #tpu.memory_space<vmem>>, vector<1x8x256xf32>
    %169 = vector.shape_cast %168 : vector<1x8x256xf32> to vector<8x256xf32>
    %170 = vector.broadcast %1 : vector<1x256xf32> to vector<8x256xf32>
    %171 = arith.mulf %169, %170 : vector<8x256xf32>
    %c0_136 = arith.constant 0 : index
    %c0_137 = arith.constant 0 : index
    %172 = vector.load %arg14[%c0_136, %c0_137] : memref<72x512xf32, #tpu.memory_space<vmem>>, vector<8x256xf32>
    tpu.vector_store %arg14[%c0_136, %c0_137], %171 {strides = array<i32>} : memref<72x512xf32, #tpu.memory_space<vmem>>, vector<8x256xf32>,
    %c0_138 = arith.constant 0 : index
    %c0_139 = arith.constant 0 : index
    %c112_140 = arith.constant 112 : index
    %173 = vector.load %arg12[%c0_138, %c0_139, %c112_140] : memref<2x8x512xf32, #tpu.memory_space<vmem>>, vector<1x8x256xf32>
    %174 = vector.shape_cast %173 : vector<1x8x256xf32> to vector<8x256xf32>
    %c8_141 = arith.constant 8 : index
    %c0_142 = arith.constant 0 : index
    %175 = vector.load %arg14[%c8_141, %c0_142] : memref<72x512xf32, #tpu.memory_space<vmem>>, vector<8x256xf32>
    tpu.vector_store %arg14[%c8_141, %c0_142], %174 {strides = array<i32>} : memref<72x512xf32, #tpu.memory_space<vmem>>, vector<8x256xf32>,
    %c0_143 = arith.constant 0 : index
    %c0_144 = arith.constant 0 : index
    %c113_145 = arith.constant 113 : index
    %176 = vector.load %arg12[%c0_143, %c0_144, %c113_145] : memref<2x8x512xf32, #tpu.memory_space<vmem>>, vector<1x8x256xf32>
    %177 = vector.shape_cast %176 : vector<1x8x256xf32> to vector<8x256xf32>
    %178 = vector.broadcast %0 : vector<1x256xf32> to vector<8x256xf32>
    %179 = arith.mulf %177, %178 : vector<8x256xf32>
    %c16_146 = arith.constant 16 : index
    %c0_147 = arith.constant 0 : index
    %180 = vector.load %arg14[%c16_146, %c0_147] : memref<72x512xf32, #tpu.memory_space<vmem>>, vector<8x256xf32>
    tpu.vector_store %arg14[%c16_146, %c0_147], %179 {strides = array<i32>} : memref<72x512xf32, #tpu.memory_space<vmem>>, vector<8x256xf32>,
    %c0_148 = arith.constant 0 : index
    %c0_149 = arith.constant 0 : index
    %c127_150 = arith.constant 127 : index
    %181 = vector.load %arg12[%c0_148, %c0_149, %c127_150] : memref<2x8x512xf32, #tpu.memory_space<vmem>>, vector<1x8x256xf32>
    %182 = vector.shape_cast %181 : vector<1x8x256xf32> to vector<8x256xf32>
    %183 = vector.broadcast %1 : vector<1x256xf32> to vector<8x256xf32>
    %184 = arith.mulf %182, %183 : vector<8x256xf32>
    %c24_151 = arith.constant 24 : index
    %c0_152 = arith.constant 0 : index
    %185 = vector.load %arg14[%c24_151, %c0_152] : memref<72x512xf32, #tpu.memory_space<vmem>>, vector<8x256xf32>
    tpu.vector_store %arg14[%c24_151, %c0_152], %184 {strides = array<i32>} : memref<72x512xf32, #tpu.memory_space<vmem>>, vector<8x256xf32>,
    %c0_153 = arith.constant 0 : index
    %c0_154 = arith.constant 0 : index
    %c128_155 = arith.constant 128 : index
    %186 = vector.load %arg12[%c0_153, %c0_154, %c128_155] : memref<2x8x512xf32, #tpu.memory_space<vmem>>, vector<1x8x256xf32>
    %187 = vector.shape_cast %186 : vector<1x8x256xf32> to vector<8x256xf32>
    %c32_156 = arith.constant 32 : index
    %c0_157 = arith.constant 0 : index
    %188 = vector.load %arg14[%c32_156, %c0_157] : memref<72x512xf32, #tpu.memory_space<vmem>>, vector<8x256xf32>
    tpu.vector_store %arg14[%c32_156, %c0_157], %187 {strides = array<i32>} : memref<72x512xf32, #tpu.memory_space<vmem>>, vector<8x256xf32>,
    %c0_158 = arith.constant 0 : index
    %c0_159 = arith.constant 0 : index
    %c129_160 = arith.constant 129 : index
    %189 = vector.load %arg12[%c0_158, %c0_159, %c129_160] : memref<2x8x512xf32, #tpu.memory_space<vmem>>, vector<1x8x256xf32>
    %190 = vector.shape_cast %189 : vector<1x8x256xf32> to vector<8x256xf32>
    %191 = vector.broadcast %0 : vector<1x256xf32> to vector<8x256xf32>
    %192 = arith.mulf %190, %191 : vector<8x256xf32>
    %c40 = arith.constant 40 : index
    %c0_161 = arith.constant 0 : index
    %193 = vector.load %arg14[%c40, %c0_161] : memref<72x512xf32, #tpu.memory_space<vmem>>, vector<8x256xf32>
    tpu.vector_store %arg14[%c40, %c0_161], %192 {strides = array<i32>} : memref<72x512xf32, #tpu.memory_space<vmem>>, vector<8x256xf32>,
    %c0_162 = arith.constant 0 : index
    %c0_163 = arith.constant 0 : index
    %c143_164 = arith.constant 143 : index
    %194 = vector.load %arg12[%c0_162, %c0_163, %c143_164] : memref<2x8x512xf32, #tpu.memory_space<vmem>>, vector<1x8x256xf32>
    %195 = vector.shape_cast %194 : vector<1x8x256xf32> to vector<8x256xf32>
    %196 = vector.broadcast %1 : vector<1x256xf32> to vector<8x256xf32>
    %197 = arith.mulf %195, %196 : vector<8x256xf32>
    %c48 = arith.constant 48 : index
    %c0_165 = arith.constant 0 : index
    %198 = vector.load %arg14[%c48, %c0_165] : memref<72x512xf32, #tpu.memory_space<vmem>>, vector<8x256xf32>
    tpu.vector_store %arg14[%c48, %c0_165], %197 {strides = array<i32>} : memref<72x512xf32, #tpu.memory_space<vmem>>, vector<8x256xf32>,
    %c0_166 = arith.constant 0 : index
    %c0_167 = arith.constant 0 : index
    %c144_168 = arith.constant 144 : index
    %199 = vector.load %arg12[%c0_166, %c0_167, %c144_168] : memref<2x8x512xf32, #tpu.memory_space<vmem>>, vector<1x8x256xf32>
    %200 = vector.shape_cast %199 : vector<1x8x256xf32> to vector<8x256xf32>
    %c56 = arith.constant 56 : index
    %c0_169 = arith.constant 0 : index
    %201 = vector.load %arg14[%c56, %c0_169] : memref<72x512xf32, #tpu.memory_space<vmem>>, vector<8x256xf32>
    tpu.vector_store %arg14[%c56, %c0_169], %200 {strides = array<i32>} : memref<72x512xf32, #tpu.memory_space<vmem>>, vector<8x256xf32>,
    %c0_170 = arith.constant 0 : index
    %c0_171 = arith.constant 0 : index
    %c145_172 = arith.constant 145 : index
    %202 = vector.load %arg12[%c0_170, %c0_171, %c145_172] : memref<2x8x512xf32, #tpu.memory_space<vmem>>, vector<1x8x256xf32>
    %203 = vector.shape_cast %202 : vector<1x8x256xf32> to vector<8x256xf32>
    %204 = vector.broadcast %0 : vector<1x256xf32> to vector<8x256xf32>
    %205 = arith.mulf %203, %204 : vector<8x256xf32>
    %c64 = arith.constant 64 : index
    %c0_173 = arith.constant 0 : index
    %206 = vector.load %arg14[%c64, %c0_173] : memref<72x512xf32, #tpu.memory_space<vmem>>, vector<8x256xf32>
    tpu.vector_store %arg14[%c64, %c0_173], %205 {strides = array<i32>} : memref<72x512xf32, #tpu.memory_space<vmem>>, vector<8x256xf32>,
    %c1_174 = arith.constant 1 : index
    %c0_175 = arith.constant 0 : index
    %c111_176 = arith.constant 111 : index
    %207 = vector.load %arg12[%c1_174, %c0_175, %c111_176] : memref<2x8x512xf32, #tpu.memory_space<vmem>>, vector<1x8x256xf32>
    %208 = vector.shape_cast %207 : vector<1x8x256xf32> to vector<8x256xf32>
    %209 = vector.broadcast %1 : vector<1x256xf32> to vector<8x256xf32>
    %210 = arith.mulf %208, %209 : vector<8x256xf32>
    %c0_177 = arith.constant 0 : index
    %c256_178 = arith.constant 256 : index
    %211 = vector.load %arg14[%c0_177, %c256_178] : memref<72x512xf32, #tpu.memory_space<vmem>>, vector<8x256xf32>
    tpu.vector_store %arg14[%c0_177, %c256_178], %210 {strides = array<i32>} : memref<72x512xf32, #tpu.memory_space<vmem>>, vector<8x256xf32>,
    %c1_179 = arith.constant 1 : index
    %c0_180 = arith.constant 0 : index
    %c112_181 = arith.constant 112 : index
    %212 = vector.load %arg12[%c1_179, %c0_180, %c112_181] : memref<2x8x512xf32, #tpu.memory_space<vmem>>, vector<1x8x256xf32>
    %213 = vector.shape_cast %212 : vector<1x8x256xf32> to vector<8x256xf32>
    %c8_182 = arith.constant 8 : index
    %c256_183 = arith.constant 256 : index
    %214 = vector.load %arg14[%c8_182, %c256_183] : memref<72x512xf32, #tpu.memory_space<vmem>>, vector<8x256xf32>
    tpu.vector_store %arg14[%c8_182, %c256_183], %213 {strides = array<i32>} : memref<72x512xf32, #tpu.memory_space<vmem>>, vector<8x256xf32>,
    %c1_184 = arith.constant 1 : index
    %c0_185 = arith.constant 0 : index
    %c113_186 = arith.constant 113 : index
    %215 = vector.load %arg12[%c1_184, %c0_185, %c113_186] : memref<2x8x512xf32, #tpu.memory_space<vmem>>, vector<1x8x256xf32>
    %216 = vector.shape_cast %215 : vector<1x8x256xf32> to vector<8x256xf32>
    %217 = vector.broadcast %0 : vector<1x256xf32> to vector<8x256xf32>
    %218 = arith.mulf %216, %217 : vector<8x256xf32>
    %c16_187 = arith.constant 16 : index
    %c256_188 = arith.constant 256 : index
    %219 = vector.load %arg14[%c16_187, %c256_188] : memref<72x512xf32, #tpu.memory_space<vmem>>, vector<8x256xf32>
    tpu.vector_store %arg14[%c16_187, %c256_188], %218 {strides = array<i32>} : memref<72x512xf32, #tpu.memory_space<vmem>>, vector<8x256xf32>,
    %c1_189 = arith.constant 1 : index
    %c0_190 = arith.constant 0 : index
    %c127_191 = arith.constant 127 : index
    %220 = vector.load %arg12[%c1_189, %c0_190, %c127_191] : memref<2x8x512xf32, #tpu.memory_space<vmem>>, vector<1x8x256xf32>
    %221 = vector.shape_cast %220 : vector<1x8x256xf32> to vector<8x256xf32>
    %222 = vector.broadcast %1 : vector<1x256xf32> to vector<8x256xf32>
    %223 = arith.mulf %221, %222 : vector<8x256xf32>
    %c24_192 = arith.constant 24 : index
    %c256_193 = arith.constant 256 : index
    %224 = vector.load %arg14[%c24_192, %c256_193] : memref<72x512xf32, #tpu.memory_space<vmem>>, vector<8x256xf32>
    tpu.vector_store %arg14[%c24_192, %c256_193], %223 {strides = array<i32>} : memref<72x512xf32, #tpu.memory_space<vmem>>, vector<8x256xf32>,
    %c1_194 = arith.constant 1 : index
    %c0_195 = arith.constant 0 : index
    %c128_196 = arith.constant 128 : index
    %225 = vector.load %arg12[%c1_194, %c0_195, %c128_196] : memref<2x8x512xf32, #tpu.memory_space<vmem>>, vector<1x8x256xf32>
    %226 = vector.shape_cast %225 : vector<1x8x256xf32> to vector<8x256xf32>
    %c32_197 = arith.constant 32 : index
    %c256_198 = arith.constant 256 : index
    %227 = vector.load %arg14[%c32_197, %c256_198] : memref<72x512xf32, #tpu.memory_space<vmem>>, vector<8x256xf32>
    tpu.vector_store %arg14[%c32_197, %c256_198], %226 {strides = array<i32>} : memref<72x512xf32, #tpu.memory_space<vmem>>, vector<8x256xf32>,
    %c1_199 = arith.constant 1 : index
    %c0_200 = arith.constant 0 : index
    %c129_201 = arith.constant 129 : index
    %228 = vector.load %arg12[%c1_199, %c0_200, %c129_201] : memref<2x8x512xf32, #tpu.memory_space<vmem>>, vector<1x8x256xf32>
    %229 = vector.shape_cast %228 : vector<1x8x256xf32> to vector<8x256xf32>
    %230 = vector.broadcast %0 : vector<1x256xf32> to vector<8x256xf32>
    %231 = arith.mulf %229, %230 : vector<8x256xf32>
    %c40_202 = arith.constant 40 : index
    %c256_203 = arith.constant 256 : index
    %232 = vector.load %arg14[%c40_202, %c256_203] : memref<72x512xf32, #tpu.memory_space<vmem>>, vector<8x256xf32>
    tpu.vector_store %arg14[%c40_202, %c256_203], %231 {strides = array<i32>} : memref<72x512xf32, #tpu.memory_space<vmem>>, vector<8x256xf32>,
    %c1_204 = arith.constant 1 : index
    %c0_205 = arith.constant 0 : index
    %c143_206 = arith.constant 143 : index
    %233 = vector.load %arg12[%c1_204, %c0_205, %c143_206] : memref<2x8x512xf32, #tpu.memory_space<vmem>>, vector<1x8x256xf32>
    %234 = vector.shape_cast %233 : vector<1x8x256xf32> to vector<8x256xf32>
    %235 = vector.broadcast %1 : vector<1x256xf32> to vector<8x256xf32>
    %236 = arith.mulf %234, %235 : vector<8x256xf32>
    %c48_207 = arith.constant 48 : index
    %c256_208 = arith.constant 256 : index
    %237 = vector.load %arg14[%c48_207, %c256_208] : memref<72x512xf32, #tpu.memory_space<vmem>>, vector<8x256xf32>
    tpu.vector_store %arg14[%c48_207, %c256_208], %236 {strides = array<i32>} : memref<72x512xf32, #tpu.memory_space<vmem>>, vector<8x256xf32>,
    %c1_209 = arith.constant 1 : index
    %c0_210 = arith.constant 0 : index
    %c144_211 = arith.constant 144 : index
    %238 = vector.load %arg12[%c1_209, %c0_210, %c144_211] : memref<2x8x512xf32, #tpu.memory_space<vmem>>, vector<1x8x256xf32>
    %239 = vector.shape_cast %238 : vector<1x8x256xf32> to vector<8x256xf32>
    %c56_212 = arith.constant 56 : index
    %c256_213 = arith.constant 256 : index
    %240 = vector.load %arg14[%c56_212, %c256_213] : memref<72x512xf32, #tpu.memory_space<vmem>>, vector<8x256xf32>
    tpu.vector_store %arg14[%c56_212, %c256_213], %239 {strides = array<i32>} : memref<72x512xf32, #tpu.memory_space<vmem>>, vector<8x256xf32>,
    %c1_214 = arith.constant 1 : index
    %c0_215 = arith.constant 0 : index
    %c145_216 = arith.constant 145 : index
    %241 = vector.load %arg12[%c1_214, %c0_215, %c145_216] : memref<2x8x512xf32, #tpu.memory_space<vmem>>, vector<1x8x256xf32>
    %242 = vector.shape_cast %241 : vector<1x8x256xf32> to vector<8x256xf32>
    %243 = vector.broadcast %0 : vector<1x256xf32> to vector<8x256xf32>
    %244 = arith.mulf %242, %243 : vector<8x256xf32>
    %c64_217 = arith.constant 64 : index
    %c256_218 = arith.constant 256 : index
    %245 = vector.load %arg14[%c64_217, %c256_218] : memref<72x512xf32, #tpu.memory_space<vmem>>, vector<8x256xf32>
    tpu.vector_store %arg14[%c64_217, %c256_218], %244 {strides = array<i32>} : memref<72x512xf32, #tpu.memory_space<vmem>>, vector<8x256xf32>,
    %c0_219 = arith.constant 0 : index
    %c0_220 = arith.constant 0 : index
    %246 = vector.load %arg4[%c0_219, %c0_220] : memref<8x72xf32, #tpu.memory_space<vmem>>, vector<8x72xf32>
    %c0_221 = arith.constant 0 : index
    %c0_222 = arith.constant 0 : index
    %247 = vector.load %arg14[%c0_221, %c0_222] : memref<72x512xf32, #tpu.memory_space<vmem>>, vector<72x512xf32>
    %cst_223 = arith.constant dense<0.000000e+00> : vector<8x512xf32>
    %248 = tpu.matmul %246, %247, %cst_223 {dimension_numbers = #tpu.dot_dimension_numbers<[1], [0], [0], [1], [0, 0, 1, 1], [], []>} : vector<8x72xf32>, vector<72x512xf32>, vector<8x512xf32> -> vector<8x512xf32>
    %c0_224 = arith.constant 0 : index
    %c0_225 = arith.constant 0 : index
    %249 = vector.load %arg5[%c0_224, %c0_225] : memref<8x1xf32, #tpu.memory_space<vmem>>, vector<8x1xf32>
    %c0_226 = arith.constant 0 : index
    %c0_227 = arith.constant 0 : index
    %250 = vector.load %arg6[%c0_226, %c0_227] : memref<8x1xf32, #tpu.memory_space<vmem>>, vector<8x1xf32>
    %cst_228 = arith.constant dense<0.000000e+00> : vector<8xf32>
    %251 = vector.multi_reduction <add>, %248, %cst_228 [1] : vector<8x512xf32> to vector<8xf32>
    %252 = vector.shape_cast %251 : vector<8xf32> to vector<8x1xf32>
    %cst_229 = arith.constant 0.001953125 : f32
    %253 = vector.broadcast %cst_229 : f32 to vector<8x1xf32>
    %254 = arith.mulf %252, %253 : vector<8x1xf32>
    %255 = vector.broadcast %254 : vector<8x1xf32> to vector<8x512xf32>
    %256 = arith.subf %248, %255 : vector<8x512xf32>
    %257 = arith.mulf %256, %256 : vector<8x512xf32>
    %cst_230 = arith.constant dense<0.000000e+00> : vector<8xf32>
    %258 = vector.multi_reduction <add>, %257, %cst_230 [1] : vector<8x512xf32> to vector<8xf32>
    %259 = vector.shape_cast %258 : vector<8xf32> to vector<8x1xf32>
    %cst_231 = arith.constant 0.001953125 : f32
    %260 = vector.broadcast %cst_231 : f32 to vector<8x1xf32>
    %261 = arith.mulf %259, %260 : vector<8x1xf32>
    %cst_232 = arith.constant 9.99999974E-6 : f32
    %262 = vector.broadcast %cst_232 : f32 to vector<8x1xf32>
    %263 = arith.addf %261, %262 : vector<8x1xf32>
    %264 = math.rsqrt %263 : vector<8x1xf32>
    %265 = arith.mulf %249, %264 : vector<8x1xf32>
    %266 = vector.broadcast %265 : vector<8x1xf32> to vector<8x512xf32>
    %267 = arith.mulf %256, %266 : vector<8x512xf32>
    %268 = vector.broadcast %250 : vector<8x1xf32> to vector<8x512xf32>
    %269 = arith.addf %267, %268 : vector<8x512xf32>
    %cst_233 = arith.constant 5.000000e-01 : f32
    %270 = vector.broadcast %cst_233 : f32 to vector<8x512xf32>
    %271 = arith.mulf %270, %269 : vector<8x512xf32>
    %cst_234 = arith.constant 0.707106769 : f32
    %272 = vector.broadcast %cst_234 : f32 to vector<8x512xf32>
    %273 = arith.mulf %269, %272 : vector<8x512xf32>
    %274 = math.absf %273 : vector<8x512xf32>
    %cst_235 = arith.constant 0.327591091 : f32
    %275 = vector.broadcast %cst_235 : f32 to vector<8x512xf32>
    %276 = arith.mulf %275, %274 : vector<8x512xf32>
    %cst_236 = arith.constant 1.000000e+00 : f32
    %277 = vector.broadcast %cst_236 : f32 to vector<8x512xf32>
    %278 = arith.addf %277, %276 : vector<8x512xf32>
    %cst_237 = arith.constant 1.000000e+00 : f32
    %279 = vector.broadcast %cst_237 : f32 to vector<8x512xf32>
    %280 = arith.divf %279, %278 : vector<8x512xf32>
    %cst_238 = arith.constant 1.06140542 : f32
    %281 = vector.broadcast %cst_238 : f32 to vector<8x512xf32>
    %282 = arith.mulf %281, %280 : vector<8x512xf32>
    %cst_239 = arith.constant -1.45315206 : f32
    %283 = vector.broadcast %cst_239 : f32 to vector<8x512xf32>
    %284 = arith.addf %282, %283 : vector<8x512xf32>
    %285 = arith.mulf %284, %280 : vector<8x512xf32>
    %cst_240 = arith.constant 1.42141378 : f32
    %286 = vector.broadcast %cst_240 : f32 to vector<8x512xf32>
    %287 = arith.addf %285, %286 : vector<8x512xf32>
    %288 = arith.mulf %287, %280 : vector<8x512xf32>
    %cst_241 = arith.constant -0.284496725 : f32
    %289 = vector.broadcast %cst_241 : f32 to vector<8x512xf32>
    %290 = arith.addf %288, %289 : vector<8x512xf32>
    %291 = arith.mulf %290, %280 : vector<8x512xf32>
    %cst_242 = arith.constant 0.254829586 : f32
    %292 = vector.broadcast %cst_242 : f32 to vector<8x512xf32>
    %293 = arith.addf %291, %292 : vector<8x512xf32>
    %294 = arith.mulf %293, %280 : vector<8x512xf32>
    %cst_243 = arith.constant 0.000000e+00 : f32
    %295 = vector.broadcast %cst_243 : f32 to vector<8x512xf32>
    %296 = arith.subf %295, %274 : vector<8x512xf32>
    %297 = arith.mulf %296, %274 : vector<8x512xf32>
    %298 = math.exp %297 : vector<8x512xf32>
    %299 = arith.mulf %294, %298 : vector<8x512xf32>
    %cst_244 = arith.constant 1.000000e+00 : f32
    %300 = vector.broadcast %cst_244 : f32 to vector<8x512xf32>
    %301 = arith.subf %300, %299 : vector<8x512xf32>
    %cst_245 = arith.constant 0.000000e+00 : f32
    %302 = vector.broadcast %cst_245 : f32 to vector<8x512xf32>
    %303 = arith.cmpf oge, %273, %302 : vector<8x512xf32>
    %cst_246 = arith.constant 0.000000e+00 : f32
    %304 = vector.broadcast %cst_246 : f32 to vector<8x512xf32>
    %305 = arith.subf %304, %301 : vector<8x512xf32>
    %306 = arith.select %303, %301, %305 : vector<8x512xi1>, vector<8x512xf32>
    %cst_247 = arith.constant 1.000000e+00 : f32
    %307 = vector.broadcast %cst_247 : f32 to vector<8x512xf32>
    %308 = arith.addf %307, %306 : vector<8x512xf32>
    %309 = arith.mulf %271, %308 : vector<8x512xf32>
    %310 = vector.extract_strided_slice %309 {offsets = [0, 0], sizes = [8, 256], strides = [1, 1]} : vector<8x512xf32> to vector<8x256xf32>
    %c0_248 = arith.constant 0 : index
    %c0_249 = arith.constant 0 : index
    %c128_250 = arith.constant 128 : index
    %311 = vector.load %arg12[%c0_248, %c0_249, %c128_250] : memref<2x8x512xf32, #tpu.memory_space<vmem>>, vector<1x8x256xf32>
    %312 = vector.shape_cast %311 : vector<1x8x256xf32> to vector<8x256xf32>
    %313 = vector.shape_cast %310 : vector<8x256xf32> to vector<1x8x256xf32>
    tpu.vector_store %arg12[%c0_248, %c0_249, %c128_250], %313 {strides = array<i32>} : memref<2x8x512xf32, #tpu.memory_space<vmem>>, vector<1x8x256xf32>,
    %314 = vector.extract_strided_slice %309 {offsets = [0, 256], sizes = [8, 256], strides = [1, 1]} : vector<8x512xf32> to vector<8x256xf32>
    %c1_251 = arith.constant 1 : index
    %c0_252 = arith.constant 0 : index
    %c128_253 = arith.constant 128 : index
    %315 = vector.load %arg12[%c1_251, %c0_252, %c128_253] : memref<2x8x512xf32, #tpu.memory_space<vmem>>, vector<1x8x256xf32>
    %316 = vector.shape_cast %315 : vector<1x8x256xf32> to vector<8x256xf32>
    %317 = vector.shape_cast %314 : vector<8x256xf32> to vector<1x8x256xf32>
    tpu.vector_store %arg12[%c1_251, %c0_252, %c128_253], %317 {strides = array<i32>} : memref<2x8x512xf32, #tpu.memory_space<vmem>>, vector<1x8x256xf32>,
    %318 = tpu.iota {dimensions = array<i32: 0>} : vector<256x64xi32>
    %c0_254 = arith.constant 0 : index
    %c0_255 = arith.constant 0 : index
    %319 = vector.load %arg9[%c0_254, %c0_255] : memref<1x64xi32, #tpu.memory_space<vmem>>, vector<1x64xi32>
    %320 = vector.broadcast %319 : vector<1x64xi32> to vector<256x64xi32>
    %321 = arith.cmpi eq, %318, %320 : vector<256x64xi32>
    %322 = arith.extui %321 : vector<256x64xi1> to vector<256x64xi32>
    %323 = arith.sitofp %322 : vector<256x64xi32> to vector<256x64xf32>
    %c0_256 = arith.constant 0 : index
    %c0_257 = arith.constant 0 : index
    %c128_258 = arith.constant 128 : index
    %324 = vector.load %arg12[%c0_256, %c0_257, %c128_258] : memref<2x8x512xf32, #tpu.memory_space<vmem>>, vector<1x8x256xf32>
    %325 = vector.shape_cast %324 : vector<1x8x256xf32> to vector<8x256xf32>
    %c0_259 = arith.constant 0 : index
    %c0_260 = arith.constant 0 : index
    %c129_261 = arith.constant 129 : index
    %326 = vector.load %arg12[%c0_259, %c0_260, %c129_261] : memref<2x8x512xf32, #tpu.memory_space<vmem>>, vector<1x8x256xf32>
    %327 = vector.shape_cast %326 : vector<1x8x256xf32> to vector<8x256xf32>
    %c0_262 = arith.constant 0 : index
    %c0_263 = arith.constant 0 : index
    %c144_264 = arith.constant 144 : index
    %328 = vector.load %arg12[%c0_262, %c0_263, %c144_264] : memref<2x8x512xf32, #tpu.memory_space<vmem>>, vector<1x8x256xf32>
    %329 = vector.shape_cast %328 : vector<1x8x256xf32> to vector<8x256xf32>
    %c0_265 = arith.constant 0 : index
    %c0_266 = arith.constant 0 : index
    %c145_267 = arith.constant 145 : index
    %330 = vector.load %arg12[%c0_265, %c0_266, %c145_267] : memref<2x8x512xf32, #tpu.memory_space<vmem>>, vector<1x8x256xf32>
    %331 = vector.shape_cast %330 : vector<1x8x256xf32> to vector<8x256xf32>
    %332 = arith.maximumf %325, %327 : vector<8x256xf32>
    %333 = arith.maximumf %329, %331 : vector<8x256xf32>
    %334 = arith.maximumf %332, %333 : vector<8x256xf32>
    %cst_268 = arith.constant dense<0.000000e+00> : vector<8x64xf32>
    %335 = tpu.matmul %334, %323, %cst_268 {dimension_numbers = #tpu.dot_dimension_numbers<[1], [0], [0], [1], [0, 0, 1, 1], [], []>} : vector<8x256xf32>, vector<256x64xf32>, vector<8x64xf32> -> vector<8x64xf32>
    %c0_269 = arith.constant 0 : index
    %c0_270 = arith.constant 0 : index
    %c0_271 = arith.constant 0 : index
    %336 = vector.load %arg10[%c0_269, %c0_270, %c0_271] : memref<2x8x64xf32, #tpu.memory_space<vmem>>, vector<1x8x64xf32>
    %337 = vector.shape_cast %336 : vector<1x8x64xf32> to vector<8x64xf32>
    %338 = vector.shape_cast %335 : vector<8x64xf32> to vector<1x8x64xf32>
    tpu.vector_store %arg10[%c0_269, %c0_270, %c0_271], %338 {strides = array<i32>} : memref<2x8x64xf32, #tpu.memory_space<vmem>>, vector<1x8x64xf32>,
    %c1_272 = arith.constant 1 : index
    %c0_273 = arith.constant 0 : index
    %c128_274 = arith.constant 128 : index
    %339 = vector.load %arg12[%c1_272, %c0_273, %c128_274] : memref<2x8x512xf32, #tpu.memory_space<vmem>>, vector<1x8x256xf32>
    %340 = vector.shape_cast %339 : vector<1x8x256xf32> to vector<8x256xf32>
    %c1_275 = arith.constant 1 : index
    %c0_276 = arith.constant 0 : index
    %c129_277 = arith.constant 129 : index
    %341 = vector.load %arg12[%c1_275, %c0_276, %c129_277] : memref<2x8x512xf32, #tpu.memory_space<vmem>>, vector<1x8x256xf32>
    %342 = vector.shape_cast %341 : vector<1x8x256xf32> to vector<8x256xf32>
    %c1_278 = arith.constant 1 : index
    %c0_279 = arith.constant 0 : index
    %c144_280 = arith.constant 144 : index
    %343 = vector.load %arg12[%c1_278, %c0_279, %c144_280] : memref<2x8x512xf32, #tpu.memory_space<vmem>>, vector<1x8x256xf32>
    %344 = vector.shape_cast %343 : vector<1x8x256xf32> to vector<8x256xf32>
    %c1_281 = arith.constant 1 : index
    %c0_282 = arith.constant 0 : index
    %c145_283 = arith.constant 145 : index
    %345 = vector.load %arg12[%c1_281, %c0_282, %c145_283] : memref<2x8x512xf32, #tpu.memory_space<vmem>>, vector<1x8x256xf32>
    %346 = vector.shape_cast %345 : vector<1x8x256xf32> to vector<8x256xf32>
    %347 = arith.maximumf %340, %342 : vector<8x256xf32>
    %348 = arith.maximumf %344, %346 : vector<8x256xf32>
    %349 = arith.maximumf %347, %348 : vector<8x256xf32>
    %cst_284 = arith.constant dense<0.000000e+00> : vector<8x64xf32>
    %350 = tpu.matmul %349, %323, %cst_284 {dimension_numbers = #tpu.dot_dimension_numbers<[1], [0], [0], [1], [0, 0, 1, 1], [], []>} : vector<8x256xf32>, vector<256x64xf32>, vector<8x64xf32> -> vector<8x64xf32>
    %c1_285 = arith.constant 1 : index
    %c0_286 = arith.constant 0 : index
    %c0_287 = arith.constant 0 : index
    %351 = vector.load %arg10[%c1_285, %c0_286, %c0_287] : memref<2x8x64xf32, #tpu.memory_space<vmem>>, vector<1x8x64xf32>
    %352 = vector.shape_cast %351 : vector<1x8x64xf32> to vector<8x64xf32>
    %353 = vector.shape_cast %350 : vector<8x64xf32> to vector<1x8x64xf32>
    tpu.vector_store %arg10[%c1_285, %c0_286, %c0_287], %353 {strides = array<i32>} : memref<2x8x64xf32, #tpu.memory_space<vmem>>, vector<1x8x64xf32>,
    return
  }
}

</mosaic_0001>

<llo_original>
// kernel: tpu_custom_call.1
$region0: #{tpu_custom_call.1}
  #allocation0 [shape = 'u32[]', space=smem, size = 0x4, offset = 0x4, fixed_abs, tag = 'smem constant byte address 0x4 - core index']
  #allocation1 [shape = 'u32[72,128]{1,0:T(1,128)}', space=vmem, size = 0x9000, scoped, tag = 'internal scratch']
  #allocation2 [shape = 'f32[2,4,512]{2,1,0:T(4,128)}', space=vmem, size = 0x4000, scoped, tag = 'scratch operand']
  #allocation3 [shape = 'f32[2,8,512]{2,1,0:T(8,128)}', space=vmem, size = 0x8000, scoped, tag = 'scratch operand']
  #allocation4 [shape = 'f32[36,512]{1,0:T(8,128)}', space=vmem, size = 0x14000, scoped, tag = 'scratch operand']
  #allocation5 [shape = 'f32[72,512]{1,0:T(8,128)}', space=vmem, size = 0x24000, scoped, tag = 'scratch operand']
  %s0 = inlined_call_operand.vmem [shape: f32[2,4,256], index: 0, kind: input, shape index: {}]
  %s1 = inlined_call_operand.vmem [shape: f32[8,36], index: 1, kind: input, shape index: {}]
  %s2 = inlined_call_operand.vmem [shape: f32[8,1], index: 2, kind: input, shape index: {}]
  %s3 = inlined_call_operand.vmem [shape: f32[8,1], index: 3, kind: input, shape index: {}]
  %s4 = inlined_call_operand.vmem [shape: f32[8,72], index: 4, kind: input, shape index: {}]
  %s5 = inlined_call_operand.vmem [shape: f32[8,1], index: 5, kind: input, shape index: {}]
  %s6 = inlined_call_operand.vmem [shape: f32[8,1], index: 6, kind: input, shape index: {}]
  %s7 = inlined_call_operand.vmem [shape: f32[1,256], index: 7, kind: input, shape index: {}]
  %s8 = inlined_call_operand.vmem [shape: f32[1,256], index: 8, kind: input, shape index: {}]
  %s9 = inlined_call_operand.vmem [shape: s32[1,64], index: 9, kind: input, shape index: {}]
  %s10 = inlined_call_operand.hbm [shape: f32[2,8,64], index: 10, kind: output, shape index: {}]
  %s11 = sld [smem:[#allocation0]]
  $region50: #{tpu_custom_call.1} parent=0
    _
  %s13 = ssub.s32 1, %s11
  %s14 = scalar_select 0, %s13, %s11
  $region1: #{tpu_custom_call.1} parent=0
    #allocation6 [shape = 'u8[8192]{0}', space=vmem, size = 0x2000, scoped, tag = 'output window, operand 0, single buffered']
    #allocation7 [shape = 's32[1]{0}', space=sflag, size = 0x4, scoped, tag = 'scoped memory for tpu_custom_call.1']
    %15 = vsyncpa [#allocation7], 0
    // Predicated region
    $region2: #{tpu_custom_call.1} parent=1 // pred_check
      _
    $region3: #{tpu_custom_call.1} parent=1 // pred_check_branch
      %17 = sbr.rel (0) target = $region5
    $region4: #{tpu_custom_call.1} parent=1 // pred_region
      _
    $region5: #{tpu_custom_call.1} parent=1 // pred_fallthru
      _
    // Predicated region
    $region6: #{tpu_custom_call.1} parent=1 // pred_check
      _
    $region7: #{tpu_custom_call.1} parent=1 // pred_check_branch
      %19 = sbr.rel (0) target = $region9
    $region8: #{tpu_custom_call.1} parent=1 // pred_region
      _
    $region9: #{tpu_custom_call.1} parent=1 // pred_fallthru
      _
    // Predicated region
    $region10: #{tpu_custom_call.1} parent=1 // pred_check
      _
    $region11: #{tpu_custom_call.1} parent=1 // pred_check_branch
      %21 = sbr.rel (0) target = $region13
    $region12: #{tpu_custom_call.1} parent=1 // pred_region
      _
    $region13: #{tpu_custom_call.1} parent=1 // pred_fallthru
      _
    // Predicated region
    $region14: #{tpu_custom_call.1} parent=1 // pred_check
      _
    $region15: #{tpu_custom_call.1} parent=1 // pred_check_branch
      %23 = sbr.rel (0) target = $region17
    $region16: #{tpu_custom_call.1} parent=1 // pred_region
      _
    $region17: #{tpu_custom_call.1} parent=1 // pred_fallthru
      _
    // Predicated region
    $region18: #{tpu_custom_call.1} parent=1 // pred_check
      _
    $region19: #{tpu_custom_call.1} parent=1 // pred_check_branch
      %25 = sbr.rel (0) target = $region21
    $region20: #{tpu_custom_call.1} parent=1 // pred_region
      _
    $region21: #{tpu_custom_call.1} parent=1 // pred_fallthru
      _
    // Predicated region
    $region22: #{tpu_custom_call.1} parent=1 // pred_check
      _
    $region23: #{tpu_custom_call.1} parent=1 // pred_check_branch
      %27 = sbr.rel (0) target = $region25
    $region24: #{tpu_custom_call.1} parent=1 // pred_region
      _
    $region25: #{tpu_custom_call.1} parent=1 // pred_fallthru
      _
    // Predicated region
    $region26: #{tpu_custom_call.1} parent=1 // pred_check
      _
    $region27: #{tpu_custom_call.1} parent=1 // pred_check_branch
      %29 = sbr.rel (0) target = $region29
    $region28: #{tpu_custom_call.1} parent=1 // pred_region
      _
    $region29: #{tpu_custom_call.1} parent=1 // pred_fallthru
      _
    // Predicated region
    $region30: #{tpu_custom_call.1} parent=1 // pred_check
      _
    $region31: #{tpu_custom_call.1} parent=1 // pred_check_branch
      %31 = sbr.rel (0) target = $region33
    $region32: #{tpu_custom_call.1} parent=1 // pred_region
      _
    $region33: #{tpu_custom_call.1} parent=1 // pred_fallthru
      _
    // Predicated region
    $region34: #{tpu_custom_call.1} parent=1 // pred_check
      _
    $region35: #{tpu_custom_call.1} parent=1 // pred_check_branch
      %33 = sbr.rel (0) target = $region37
    $region36: #{tpu_custom_call.1} parent=1 // pred_region
      _
    $region37: #{tpu_custom_call.1} parent=1 // pred_fallthru
      _
    // Predicated region
    $region38: #{tpu_custom_call.1} parent=1 // pred_check
      _
    $region39: #{tpu_custom_call.1} parent=1 // pred_check_branch
      %35 = sbr.rel (0) target = $region41
    $region40: #{tpu_custom_call.1} parent=1 // pred_region
      _
    $region41: #{tpu_custom_call.1} parent=1 // pred_fallthru
      _
    %v36 = vld [vmem:[%s7] sm:$0x3]
    %v37 = vld [vmem:[%s8] sm:$0x3]
    %v38 = vld [vmem:[%s0] sm:$0xff]
    %s39 = scalar_lea.vmem %s0, 8
    %v40 = vld [vmem:[%s39] sm:$0xff]
    %41 = vst [vmem:[#allocation2] sm:$0xf] 0.0
    %42 = vst [vmem:[#allocation2 + $0x10] sm:$0xf] 0.0
    %43 = vst [vmem:[#allocation2 + $0xc] sm:$0xf] 0.0
    %44 = vst [vmem:[#allocation2 + $0x1c] sm:$0xf] 0.0
    %45 = vst [vmem:[#allocation2 + $0x4] sm:$0xff] %v38
    %s46 = scalar_lea.vmem [#allocation2], 16
    %47 = vst [vmem:[%s46 + $0x4] sm:$0xff] %v40
    %v48 = vld [vmem:[#allocation2] sm:$0xff]
    %v49 = vld [vmem:[#allocation2 + $0x8] sm:$0xf]
    %v51 = vperm.slane %v37, 0
    %v52 = vperm.slane %v37, 1
    %v53 = vrot.slane %v52, 4
    %vm54 = vcmask 1043456
    %v55 = vsel %vm54, %v51, %v53
    %56 = vrot.lane.b32.xlu0 %v55, 111
    %v57 = vpop.permute.xlu0 %56
    %v58 = vrot.slane %v57, 4
    %vm59 = vcmask 908288
    %v60 = vsel %vm59, %v58, %v57
    %v63 = vmul.f32 %v48, %v60
    %v64 = vmul.f32 %v49, %v58
    %67 = vst [vmem:[#allocation1] ss:$2 sm:$0xff] %v63
    %s68 = scalar_lea.vmem [#allocation1], 16
    %69 = vst [vmem:[%s68] ss:$2 sm:$0xff] %v64
    %v70 = vld.sshfl [vmem:[#allocation1] sm:$0xff pattern:$0x75316420]
    %v71 = vld.sshfl [vmem:[#allocation1 + $0x8] sm:$0xff pattern:$0x75316420]
    %v72 = vld.sshfl [vmem:[#allocation1 + $0x10] sm:$0xff pattern:$0x75316420]
    %73 = vrot.lane.b32.xlu0 %v70, 17
    %v74 = vpop.permute.xlu0 %73
    %75 = vrot.lane.b32.xlu0 %v71, 17
    %v76 = vpop.permute.xlu0 %75
    %77 = vrot.lane.b32.xlu0 %v72, 17
    %v78 = vpop.permute.xlu0 %77
    %vm79 = vcmask 138240
    %v80 = vsel %vm79, %v74, %v76
    %v81 = vsel %vm79, %v76, %v78
    %84 = vst [vmem:[#allocation4] sm:$0xf] %v80
    %85 = vst [vmem:[#allocation4 + $0x8] sm:$0xf] %v81
    %v86 = vld [vmem:[#allocation2] sm:$0xff]
    %v87 = vld [vmem:[#allocation2 + $0x8] sm:$0xf]
    %s90 = scalar_lea.vmem [#allocation1], 1
    %91 = vst [vmem:[%s90] ss:$2 sm:$0xff] %v86
    %s92 = scalar_lea.vmem [#allocation1], 17
    %93 = vst [vmem:[%s92] ss:$2 sm:$0xff] %v87
    %v94 = vld.sshfl [vmem:[#allocation1] sm:$0xff pattern:$0x75316420]
    %v95 = vld.sshfl [vmem:[#allocation1 + $0x8] sm:$0xff pattern:$0x75316420]
    %v96 = vld.sshfl [vmem:[#allocation1 + $0x10] sm:$0xff pattern:$0x75316420]
    %97 = vrot.lane.b32.xlu0 %v94, 16
    %v98 = vpop.permute.xlu0 %97
    %99 = vrot.lane.b32.xlu0 %v95, 16
    %v100 = vpop.permute.xlu0 %99
    %101 = vrot.lane.b32.xlu0 %v96, 16
    %v102 = vpop.permute.xlu0 %101
    %vm103 = vcmask 130048
    %v104 = vsel %vm103, %v98, %v100
    %v105 = vsel %vm103, %v100, %v102
    %108 = vst [vmem:[#allocation4] sm:$0xf0] %v104
    %109 = vst [vmem:[#allocation4 + $0x8] sm:$0xf0] %v105
    %v110 = vld [vmem:[#allocation2] sm:$0xff]
    %v111 = vld [vmem:[#allocation2 + $0x8] sm:$0xf]
    %v113 = vperm.slane %v36, 0
    %v114 = vperm.slane %v36, 1
    %v115 = vrot.slane %v114, 4
    %v116 = vsel %vm54, %v113, %v115
    %117 = vrot.lane.b32.xlu0 %v116, 113
    %v118 = vpop.permute.xlu0 %117
    %v119 = vrot.slane %v118, 4
    %vm120 = vcmask 924672
    %v121 = vsel %vm120, %v119, %v118
    %v124 = vmul.f32 %v110, %v121
    %v125 = vmul.f32 %v111, %v119
    %128 = vst [vmem:[#allocation1] ss:$2 sm:$0xff] %v124
    %s129 = scalar_lea.vmem [#allocation1], 16
    %130 = vst [vmem:[%s129] ss:$2 sm:$0xff] %v125
    %v131 = vld.sshfl [vmem:[#allocation1] sm:$0xff pattern:$0x75316420]
    %v132 = vld.sshfl [vmem:[#allocation1 + $0x8] sm:$0xff pattern:$0x75316420]
    %v133 = vld.sshfl [vmem:[#allocation1 + $0x10] sm:$0xff pattern:$0x75316420]
    %134 = vrot.lane.b32.xlu0 %v131, 15
    %v135 = vpop.permute.xlu0 %134
    %136 = vrot.lane.b32.xlu0 %v132, 15
    %v137 = vpop.permute.xlu0 %136
    %138 = vrot.lane.b32.xlu0 %v133, 15
    %v139 = vpop.permute.xlu0 %138
    %vm140 = vcmask 121856
    %v141 = vsel %vm140, %v135, %v137
    %v142 = vsel %vm140, %v137, %v139
    %145 = vst [vmem:[#allocation4 + $0x20] sm:$0xf] %v141
    %146 = vst [vmem:[#allocation4 + $0x28] sm:$0xf] %v142
    %v147 = vld [vmem:[#allocation2] sm:$0xff]
    %v148 = vld [vmem:[#allocation2 + $0x8] sm:$0xf]
    %149 = vrot.lane.b32.xlu0 %v55, 127
    %v150 = vpop.permute.xlu0 %149
    %v151 = vrot.slane %v150, 4
    %vm152 = vcmask 1039360
    %v153 = vsel %vm152, %v151, %v150
    %v156 = vmul.f32 %v147, %v153
    %v157 = vmul.f32 %v148, %v151
    %s160 = scalar_lea.vmem [#allocation1], 1
    %161 = vst [vmem:[%s160] ss:$2 sm:$0xff] %v156
    %s162 = scalar_lea.vmem [#allocation1], 17
    %163 = vst [vmem:[%s162] ss:$2 sm:$0xff] %v157
    %v164 = vld.sshfl [vmem:[#allocation1] sm:$0xff pattern:$0x75316420]
    %v165 = vld.sshfl [vmem:[#allocation1 + $0x8] sm:$0xff pattern:$0x75316420]
    %v166 = vld.sshfl [vmem:[#allocation1 + $0x10] sm:$0xff pattern:$0x75316420]
    %167 = vrot.lane.b32.xlu0 %v164, 1
    %v168 = vpop.permute.xlu0 %167
    %169 = vrot.lane.b32.xlu0 %v165, 1
    %v170 = vpop.permute.xlu0 %169
    %171 = vrot.lane.b32.xlu0 %v166, 1
    %v172 = vpop.permute.xlu0 %171
    %vm173 = vcmask 7168
    %v174 = vsel %vm173, %v168, %v170
    %v175 = vsel %vm173, %v170, %v172
    %178 = vst [vmem:[#allocation4 + $0x20] sm:$0xf0] %v174
    %179 = vst [vmem:[#allocation4 + $0x28] sm:$0xf0] %v175
    %v180 = vld [vmem:[#allocation2 + $0x4] sm:$0xff]
    %182 = vst [vmem:[#allocation1] ss:$2 sm:$0xff] %v180
    %v183 = vld.sshfl [vmem:[#allocation1] sm:$0xff pattern:$0x75316420]
    %v184 = vld.sshfl [vmem:[#allocation1 + $0x8] sm:$0xff pattern:$0x75316420]
    %187 = vst [vmem:[#allocation4 + $0x40] sm:$0xf] %v183
    %188 = vst [vmem:[#allocation4 + $0x48] sm:$0xf] %v184
    %v189 = vld [vmem:[#allocation2 + $0x4] sm:$0xff]
    %v190 = vld [vmem:[#allocation2 + $0xc] sm:$0xf]
    %191 = vrot.lane.b32.xlu0 %v116, 1
    %v192 = vpop.permute.xlu0 %191
    %v193 = vrot.slane %v192, 4
    %v194 = vsel %vm173, %v193, %v192
    %v197 = vmul.f32 %v189, %v194
    %v198 = vmul.f32 %v190, %v193
    %s201 = scalar_lea.vmem [#allocation1], 1
    %202 = vst [vmem:[%s201] ss:$2 sm:$0xff] %v197
    %s203 = scalar_lea.vmem [#allocation1], 17
    %204 = vst [vmem:[%s203] ss:$2 sm:$0xff] %v198
    %v205 = vld.sshfl [vmem:[#allocation1] sm:$0xff pattern:$0x75316420]
    %v206 = vld.sshfl [vmem:[#allocation1 + $0x8] sm:$0xff pattern:$0x75316420]
    %v207 = vld.sshfl [vmem:[#allocation1 + $0x10] sm:$0xff pattern:$0x75316420]
    %208 = vrot.lane.b32.xlu0 %v205, 127
    %v209 = vpop.permute.xlu0 %208
    %210 = vrot.lane.b32.xlu0 %v206, 127
    %v211 = vpop.permute.xlu0 %210
    %212 = vrot.lane.b32.xlu0 %v207, 127
    %v213 = vpop.permute.xlu0 %212
    %v214 = vsel %vm152, %v209, %v211
    %v215 = vsel %vm152, %v211, %v213
    %218 = vst [vmem:[#allocation4 + $0x40] sm:$0xf0] %v214
    %219 = vst [vmem:[#allocation4 + $0x48] sm:$0xf0] %v215
    %v220 = vld [vmem:[#allocation2 + $0x4] sm:$0xff]
    %v221 = vld [vmem:[#allocation2 + $0xc] sm:$0xf]
    %222 = vrot.lane.b32.xlu0 %v55, 15
    %v223 = vpop.permute.xlu0 %222
    %v224 = vrot.slane %v223, 4
    %v225 = vsel %vm140, %v224, %v223
    %v228 = vmul.f32 %v220, %v225
    %v229 = vmul.f32 %v221, %v224
    %232 = vst [vmem:[#allocation1] ss:$2 sm:$0xff] %v228
    %s233 = scalar_lea.vmem [#allocation1], 16
    %234 = vst [vmem:[%s233] ss:$2 sm:$0xff] %v229
    %v235 = vld.sshfl [vmem:[#allocation1] sm:$0xff pattern:$0x75316420]
    %v236 = vld.sshfl [vmem:[#allocation1 + $0x8] sm:$0xff pattern:$0x75316420]
    %v237 = vld.sshfl [vmem:[#allocation1 + $0x10] sm:$0xff pattern:$0x75316420]
    %238 = vrot.lane.b32.xlu0 %v235, 113
    %v239 = vpop.permute.xlu0 %238
    %240 = vrot.lane.b32.xlu0 %v236, 113
    %v241 = vpop.permute.xlu0 %240
    %242 = vrot.lane.b32.xlu0 %v237, 113
    %v243 = vpop.permute.xlu0 %242
    %v244 = vsel %vm120, %v239, %v241
    %v245 = vsel %vm120, %v241, %v243
    %248 = vst [vmem:[#allocation4 + $0x60] sm:$0xf] %v244
    %249 = vst [vmem:[#allocation4 + $0x68] sm:$0xf] %v245
    %v250 = vld [vmem:[#allocation2 + $0x4] sm:$0xff]
    %v251 = vld [vmem:[#allocation2 + $0xc] sm:$0xf]
    %s254 = scalar_lea.vmem [#allocation1], 1
    %255 = vst [vmem:[%s254] ss:$2 sm:$0xff] %v250
    %s256 = scalar_lea.vmem [#allocation1], 17
    %257 = vst [vmem:[%s256] ss:$2 sm:$0xff] %v251
    %v258 = vld.sshfl [vmem:[#allocation1] sm:$0xff pattern:$0x75316420]
    %v259 = vld.sshfl [vmem:[#allocation1 + $0x8] sm:$0xff pattern:$0x75316420]
    %v260 = vld.sshfl [vmem:[#allocation1 + $0x10] sm:$0xff pattern:$0x75316420]
    %261 = vrot.lane.b32.xlu0 %v258, 112
    %v262 = vpop.permute.xlu0 %261
    %263 = vrot.lane.b32.xlu0 %v259, 112
    %v264 = vpop.permute.xlu0 %263
    %265 = vrot.lane.b32.xlu0 %v260, 112
    %v266 = vpop.permute.xlu0 %265
    %vm267 = vcmask 916480
    %v268 = vsel %vm267, %v262, %v264
    %v269 = vsel %vm267, %v264, %v266
    %272 = vst [vmem:[#allocation4 + $0x60] sm:$0xf0] %v268
    %273 = vst [vmem:[#allocation4 + $0x68] sm:$0xf0] %v269
    %v274 = vld [vmem:[#allocation2 + $0x4] sm:$0xff]
    %v275 = vld [vmem:[#allocation2 + $0xc] sm:$0xf]
    %276 = vrot.lane.b32.xlu0 %v116, 17
    %v277 = vpop.permute.xlu0 %276
    %v278 = vrot.slane %v277, 4
    %v279 = vsel %vm79, %v278, %v277
    %v282 = vmul.f32 %v274, %v279
    %v283 = vmul.f32 %v275, %v278
    %286 = vst [vmem:[#allocation1] ss:$2 sm:$0xff] %v282
    %s287 = scalar_lea.vmem [#allocation1], 16
    %288 = vst [vmem:[%s287] ss:$2 sm:$0xff] %v283
    %v289 = vld.sshfl [vmem:[#allocation1] sm:$0xff pattern:$0x75316420]
    %v290 = vld.sshfl [vmem:[#allocation1 + $0x8] sm:$0xff pattern:$0x75316420]
    %v291 = vld.sshfl [vmem:[#allocation1 + $0x10] sm:$0xff pattern:$0x75316420]
    %292 = vrot.lane.b32.xlu0 %v289, 111
    %v293 = vpop.permute.xlu0 %292
    %294 = vrot.lane.b32.xlu0 %v290, 111
    %v295 = vpop.permute.xlu0 %294
    %296 = vrot.lane.b32.xlu0 %v291, 111
    %v297 = vpop.permute.xlu0 %296
    %v298 = vsel %vm59, %v293, %v295
    %v299 = vsel %vm59, %v295, %v297
    %302 = vst [vmem:[#allocation4 + $0x80] sm:$0xf] %v298
    %303 = vst [vmem:[#allocation4 + $0x88] sm:$0xf] %v299
    %v304 = vld [vmem:[%s46] sm:$0xff]
    %v305 = vld [vmem:[%s46 + $0x8] sm:$0xf]
    %v306 = vmul.f32 %v304, %v60
    %v307 = vmul.f32 %v305, %v58
    %310 = vst [vmem:[#allocation1] ss:$2 sm:$0xff] %v306
    %s311 = scalar_lea.vmem [#allocation1], 16
    %312 = vst [vmem:[%s311] ss:$2 sm:$0xff] %v307
    %v313 = vld.sshfl [vmem:[#allocation1] sm:$0xff pattern:$0x75316420]
    %v314 = vld.sshfl [vmem:[#allocation1 + $0x8] sm:$0xff pattern:$0x75316420]
    %v315 = vld.sshfl [vmem:[#allocation1 + $0x10] sm:$0xff pattern:$0x75316420]
    %316 = vrot.lane.b32.xlu0 %v313, 17
    %v317 = vpop.permute.xlu0 %316
    %318 = vrot.lane.b32.xlu0 %v314, 17
    %v319 = vpop.permute.xlu0 %318
    %320 = vrot.lane.b32.xlu0 %v315, 17
    %v321 = vpop.permute.xlu0 %320
    %v322 = vsel %vm79, %v317, %v319
    %v323 = vsel %vm79, %v319, %v321
    %326 = vst [vmem:[#allocation4 + $0x10] sm:$0xf] %v322
    %327 = vst [vmem:[#allocation4 + $0x18] sm:$0xf] %v323
    %v328 = vld [vmem:[%s46] sm:$0xff]
    %v329 = vld [vmem:[%s46 + $0x8] sm:$0xf]
    %s332 = scalar_lea.vmem [#allocation1], 1
    %333 = vst [vmem:[%s332] ss:$2 sm:$0xff] %v328
    %s334 = scalar_lea.vmem [#allocation1], 17
    %335 = vst [vmem:[%s334] ss:$2 sm:$0xff] %v329
    %v336 = vld.sshfl [vmem:[#allocation1] sm:$0xff pattern:$0x75316420]
    %v337 = vld.sshfl [vmem:[#allocation1 + $0x8] sm:$0xff pattern:$0x75316420]
    %v338 = vld.sshfl [vmem:[#allocation1 + $0x10] sm:$0xff pattern:$0x75316420]
    %339 = vrot.lane.b32.xlu0 %v336, 16
    %v340 = vpop.permute.xlu0 %339
    %341 = vrot.lane.b32.xlu0 %v337, 16
    %v342 = vpop.permute.xlu0 %341
    %343 = vrot.lane.b32.xlu0 %v338, 16
    %v344 = vpop.permute.xlu0 %343
    %v345 = vsel %vm103, %v340, %v342
    %v346 = vsel %vm103, %v342, %v344
    %349 = vst [vmem:[#allocation4 + $0x10] sm:$0xf0] %v345
    %350 = vst [vmem:[#allocation4 + $0x18] sm:$0xf0] %v346
    %v351 = vld [vmem:[%s46] sm:$0xff]
    %v352 = vld [vmem:[%s46 + $0x8] sm:$0xf]
    %v353 = vmul.f32 %v351, %v121
    %v354 = vmul.f32 %v352, %v119
    %357 = vst [vmem:[#allocation1] ss:$2 sm:$0xff] %v353
    %s358 = scalar_lea.vmem [#allocation1], 16
    %359 = vst [vmem:[%s358] ss:$2 sm:$0xff] %v354
    %v360 = vld.sshfl [vmem:[#allocation1] sm:$0xff pattern:$0x75316420]
    %v361 = vld.sshfl [vmem:[#allocation1 + $0x8] sm:$0xff pattern:$0x75316420]
    %v362 = vld.sshfl [vmem:[#allocation1 + $0x10] sm:$0xff pattern:$0x75316420]
    %363 = vrot.lane.b32.xlu0 %v360, 15
    %v364 = vpop.permute.xlu0 %363
    %365 = vrot.lane.b32.xlu0 %v361, 15
    %v366 = vpop.permute.xlu0 %365
    %367 = vrot.lane.b32.xlu0 %v362, 15
    %v368 = vpop.permute.xlu0 %367
    %v369 = vsel %vm140, %v364, %v366
    %v370 = vsel %vm140, %v366, %v368
    %373 = vst [vmem:[#allocation4 + $0x30] sm:$0xf] %v369
    %374 = vst [vmem:[#allocation4 + $0x38] sm:$0xf] %v370
    %v375 = vld [vmem:[%s46] sm:$0xff]
    %v376 = vld [vmem:[%s46 + $0x8] sm:$0xf]
    %v377 = vmul.f32 %v375, %v153
    %v378 = vmul.f32 %v376, %v151
    %s381 = scalar_lea.vmem [#allocation1], 1
    %382 = vst [vmem:[%s381] ss:$2 sm:$0xff] %v377
    %s383 = scalar_lea.vmem [#allocation1], 17
    %384 = vst [vmem:[%s383] ss:$2 sm:$0xff] %v378
    %v385 = vld.sshfl [vmem:[#allocation1] sm:$0xff pattern:$0x75316420]
    %v386 = vld.sshfl [vmem:[#allocation1 + $0x8] sm:$0xff pattern:$0x75316420]
    %v387 = vld.sshfl [vmem:[#allocation1 + $0x10] sm:$0xff pattern:$0x75316420]
    %388 = vrot.lane.b32.xlu0 %v385, 1
    %v389 = vpop.permute.xlu0 %388
    %390 = vrot.lane.b32.xlu0 %v386, 1
    %v391 = vpop.permute.xlu0 %390
    %392 = vrot.lane.b32.xlu0 %v387, 1
    %v393 = vpop.permute.xlu0 %392
    %v394 = vsel %vm173, %v389, %v391
    %v395 = vsel %vm173, %v391, %v393
    %398 = vst [vmem:[#allocation4 + $0x30] sm:$0xf0] %v394
    %399 = vst [vmem:[#allocation4 + $0x38] sm:$0xf0] %v395
    %v400 = vld [vmem:[%s46 + $0x4] sm:$0xff]
    %402 = vst [vmem:[#allocation1] ss:$2 sm:$0xff] %v400
    %v403 = vld.sshfl [vmem:[#allocation1] sm:$0xff pattern:$0x75316420]
    %v404 = vld.sshfl [vmem:[#allocation1 + $0x8] sm:$0xff pattern:$0x75316420]
    %407 = vst [vmem:[#allocation4 + $0x50] sm:$0xf] %v403
    %408 = vst [vmem:[#allocation4 + $0x58] sm:$0xf] %v404
    %v409 = vld [vmem:[%s46 + $0x4] sm:$0xff]
    %v410 = vld [vmem:[%s46 + $0xc] sm:$0xf]
    %v411 = vmul.f32 %v409, %v194
    %v412 = vmul.f32 %v410, %v193
    %s415 = scalar_lea.vmem [#allocation1], 1
    %416 = vst [vmem:[%s415] ss:$2 sm:$0xff] %v411
    %s417 = scalar_lea.vmem [#allocation1], 17
    %418 = vst [vmem:[%s417] ss:$2 sm:$0xff] %v412
    %v419 = vld.sshfl [vmem:[#allocation1] sm:$0xff pattern:$0x75316420]
    %v420 = vld.sshfl [vmem:[#allocation1 + $0x8] sm:$0xff pattern:$0x75316420]
    %v421 = vld.sshfl [vmem:[#allocation1 + $0x10] sm:$0xff pattern:$0x75316420]
    %422 = vrot.lane.b32.xlu0 %v419, 127
    %v423 = vpop.permute.xlu0 %422
    %424 = vrot.lane.b32.xlu0 %v420, 127
    %v425 = vpop.permute.xlu0 %424
    %426 = vrot.lane.b32.xlu0 %v421, 127
    %v427 = vpop.permute.xlu0 %426
    %v428 = vsel %vm152, %v423, %v425
    %v429 = vsel %vm152, %v425, %v427
    %432 = vst [vmem:[#allocation4 + $0x50] sm:$0xf0] %v428
    %433 = vst [vmem:[#allocation4 + $0x58] sm:$0xf0] %v429
    %v434 = vld [vmem:[%s46 + $0x4] sm:$0xff]
    %v435 = vld [vmem:[%s46 + $0xc] sm:$0xf]
    %v436 = vmul.f32 %v434, %v225
    %v437 = vmul.f32 %v435, %v224
    %440 = vst [vmem:[#allocation1] ss:$2 sm:$0xff] %v436
    %s441 = scalar_lea.vmem [#allocation1], 16
    %442 = vst [vmem:[%s441] ss:$2 sm:$0xff] %v437
    %v443 = vld.sshfl [vmem:[#allocation1] sm:$0xff pattern:$0x75316420]
    %v444 = vld.sshfl [vmem:[#allocation1 + $0x8] sm:$0xff pattern:$0x75316420]
    %v445 = vld.sshfl [vmem:[#allocation1 + $0x10] sm:$0xff pattern:$0x75316420]
    %446 = vrot.lane.b32.xlu0 %v443, 113
    %v447 = vpop.permute.xlu0 %446
    %448 = vrot.lane.b32.xlu0 %v444, 113
    %v449 = vpop.permute.xlu0 %448
    %450 = vrot.lane.b32.xlu0 %v445, 113
    %v451 = vpop.permute.xlu0 %450
    %v452 = vsel %vm120, %v447, %v449
    %v453 = vsel %vm120, %v449, %v451
    %456 = vst [vmem:[#allocation4 + $0x70] sm:$0xf] %v452
    %457 = vst [vmem:[#allocation4 + $0x78] sm:$0xf] %v453
    %v458 = vld [vmem:[%s46 + $0x4] sm:$0xff]
    %v459 = vld [vmem:[%s46 + $0xc] sm:$0xf]
    %s462 = scalar_lea.vmem [#allocation1], 1
    %463 = vst [vmem:[%s462] ss:$2 sm:$0xff] %v458
    %s464 = scalar_lea.vmem [#allocation1], 17
    %465 = vst [vmem:[%s464] ss:$2 sm:$0xff] %v459
    %v466 = vld.sshfl [vmem:[#allocation1] sm:$0xff pattern:$0x75316420]
    %v467 = vld.sshfl [vmem:[#allocation1 + $0x8] sm:$0xff pattern:$0x75316420]
    %v468 = vld.sshfl [vmem:[#allocation1 + $0x10] sm:$0xff pattern:$0x75316420]
    %469 = vrot.lane.b32.xlu0 %v466, 112
    %v470 = vpop.permute.xlu0 %469
    %471 = vrot.lane.b32.xlu0 %v467, 112
    %v472 = vpop.permute.xlu0 %471
    %473 = vrot.lane.b32.xlu0 %v468, 112
    %v474 = vpop.permute.xlu0 %473
    %v475 = vsel %vm267, %v470, %v472
    %v476 = vsel %vm267, %v472, %v474
    %479 = vst [vmem:[#allocation4 + $0x70] sm:$0xf0] %v475
    %480 = vst [vmem:[#allocation4 + $0x78] sm:$0xf0] %v476
    %v481 = vld [vmem:[%s46 + $0x4] sm:$0xff]
    %v482 = vld [vmem:[%s46 + $0xc] sm:$0xf]
    %v483 = vmul.f32 %v481, %v279
    %v484 = vmul.f32 %v482, %v278
    %487 = vst [vmem:[#allocation1] ss:$2 sm:$0xff] %v483
    %s488 = scalar_lea.vmem [#allocation1], 16
    %489 = vst [vmem:[%s488] ss:$2 sm:$0xff] %v484
    %v490 = vld.sshfl [vmem:[#allocation1] sm:$0xff pattern:$0x75316420]
    %v491 = vld.sshfl [vmem:[#allocation1 + $0x8] sm:$0xff pattern:$0x75316420]
    %v492 = vld.sshfl [vmem:[#allocation1 + $0x10] sm:$0xff pattern:$0x75316420]
    %493 = vrot.lane.b32.xlu0 %v490, 111
    %v494 = vpop.permute.xlu0 %493
    %495 = vrot.lane.b32.xlu0 %v491, 111
    %v496 = vpop.permute.xlu0 %495
    %497 = vrot.lane.b32.xlu0 %v492, 111
    %v498 = vpop.permute.xlu0 %497
    %v499 = vsel %vm59, %v494, %v496
    %v500 = vsel %vm59, %v496, %v498
    %503 = vst [vmem:[#allocation4 + $0x90] sm:$0xf] %v499
    %504 = vst [vmem:[#allocation4 + $0x98] sm:$0xf] %v500
    %v505 = vld [vmem:[%s1] sm:$0xff]
    %v506 = vld [vmem:[#allocation4] sm:$0xff]
    %v507 = vld [vmem:[#allocation4 + $0x8] sm:$0xff]
    %v508 = vld [vmem:[#allocation4 + $0x10] sm:$0xff]
    %v509 = vld [vmem:[#allocation4 + $0x18] sm:$0xff]
    %v510 = vld [vmem:[#allocation4 + $0x20] sm:$0xff]
    %v511 = vld [vmem:[#allocation4 + $0x28] sm:$0xff]
    %v512 = vld [vmem:[#allocation4 + $0x30] sm:$0xff]
    %v513 = vld [vmem:[#allocation4 + $0x38] sm:$0xff]
    %v514 = vld [vmem:[#allocation4 + $0x40] sm:$0xff]
    %v515 = vld [vmem:[#allocation4 + $0x48] sm:$0xff]
    %v516 = vld [vmem:[#allocation4 + $0x50] sm:$0xff]
    %v517 = vld [vmem:[#allocation4 + $0x58] sm:$0xff]
    %v518 = vld [vmem:[#allocation4 + $0x60] sm:$0xff]
    %v519 = vld [vmem:[#allocation4 + $0x68] sm:$0xff]
    %v520 = vld [vmem:[#allocation4 + $0x70] sm:$0xff]
    %v521 = vld [vmem:[#allocation4 + $0x78] sm:$0xff]
    %v522 = vld [vmem:[#allocation4 + $0x80] sm:$0xf]
    %v523 = vld [vmem:[#allocation4 + $0x88] sm:$0xf]
    %v524 = vld [vmem:[#allocation4 + $0x90] sm:$0xf]
    %v525 = vld [vmem:[#allocation4 + $0x98] sm:$0xf]
    %vm526 = vcmask 293888
    %v528 = vsel %vm526, %v505, 0
    %v531 = vsel %vm54, %v522, 0
    %v534 = vsel %vm54, %v523, 0
    %v537 = vsel %vm54, %v524, 0
    %v540 = vsel %vm54, %v525, 0
    %542 = vmatpush.msra.mxu0 0.0
    %543 = vmatpush.msra.mxu0 0.0
    %544 = vmatpush.msra.mxu0 0.0
    %545 = vmatpush.msra.mxu0 0.0
    %546 = vmatpush.msra.mxu0 0.0
    %547 = vmatpush.msra.mxu0 0.0
    %548 = vmatpush.msra.mxu0 0.0
    %549 = vmatpush.msra.mxu0 0.0
    %550 = vmatpush.msra.mxu0 0.0
    %551 = vmatpush.msra.mxu0 0.0
    %552 = vmatpush.msra.mxu0 0.0
    %553 = vmatpush.msra.mxu0 %v531
    %554 = vmatpush.msra.mxu0 %v518
    %555 = vmatpush.msra.mxu0 %v514
    %556 = vmatpush.msra.mxu0 %v510
    %557 = vmatpush.msra.mxu0 %v506
    %558 = vmatmul.f32.gmra.mxu0 %v528
    %v559 = vpop.f32.mrf.mxu0
    %v560 = vadd.f32 0.0, %v559
    %561 = vdwg.mxu0
    %562 = vmatpush.msra.mxu0 0.0
    %563 = vmatpush.msra.mxu0 0.0
    %564 = vmatpush.msra.mxu0 0.0
    %565 = vmatpush.msra.mxu0 0.0
    %566 = vmatpush.msra.mxu0 0.0
    %567 = vmatpush.msra.mxu0 0.0
    %568 = vmatpush.msra.mxu0 0.0
    %569 = vmatpush.msra.mxu0 0.0
    %570 = vmatpush.msra.mxu0 0.0
    %571 = vmatpush.msra.mxu0 0.0
    %572 = vmatpush.msra.mxu0 0.0
    %573 = vmatpush.msra.mxu0 %v534
    %574 = vmatpush.msra.mxu0 %v519
    %575 = vmatpush.msra.mxu0 %v515
    %576 = vmatpush.msra.mxu0 %v511
    %577 = vmatpush.msra.mxu0 %v507
    %578 = vmatmul.f32.gmra.mxu0 %v528
    %v579 = vpop.f32.mrf.mxu0
    %v580 = vadd.f32 0.0, %v579
    %581 = vdwg.mxu0
    %582 = vmatpush.msra.mxu0 0.0
    %583 = vmatpush.msra.mxu0 0.0
    %584 = vmatpush.msra.mxu0 0.0
    %585 = vmatpush.msra.mxu0 0.0
    %586 = vmatpush.msra.mxu0 0.0
    %587 = vmatpush.msra.mxu0 0.0
    %588 = vmatpush.msra.mxu0 0.0
    %589 = vmatpush.msra.mxu0 0.0
    %590 = vmatpush.msra.mxu0 0.0
    %591 = vmatpush.msra.mxu0 0.0
    %592 = vmatpush.msra.mxu0 0.0
    %593 = vmatpush.msra.mxu0 %v537
    %594 = vmatpush.msra.mxu0 %v520
    %595 = vmatpush.msra.mxu0 %v516
    %596 = vmatpush.msra.mxu0 %v512
    %597 = vmatpush.msra.mxu0 %v508
    %598 = vmatmul.f32.gmra.mxu0 %v528
    %v599 = vpop.f32.mrf.mxu0
    %v600 = vadd.f32 0.0, %v599
    %601 = vdwg.mxu0
    %602 = vmatpush.msra.mxu0 0.0
    %603 = vmatpush.msra.mxu0 0.0
    %604 = vmatpush.msra.mxu0 0.0
    %605 = vmatpush.msra.mxu0 0.0
    %606 = vmatpush.msra.mxu0 0.0
    %607 = vmatpush.msra.mxu0 0.0
    %608 = vmatpush.msra.mxu0 0.0
    %609 = vmatpush.msra.mxu0 0.0
    %610 = vmatpush.msra.mxu0 0.0
    %611 = vmatpush.msra.mxu0 0.0
    %612 = vmatpush.msra.mxu0 0.0
    %613 = vmatpush.msra.mxu0 %v540
    %614 = vmatpush.msra.mxu0 %v521
    %615 = vmatpush.msra.mxu0 %v517
    %616 = vmatpush.msra.mxu0 %v513
    %617 = vmatpush.msra.mxu0 %v509
    %618 = vmatmul.f32.gmra.mxu0 %v528
    %v619 = vpop.f32.mrf.mxu0
    %v620 = vadd.f32 0.0, %v619
    %621 = vdwg.mxu0
    %v622 = vld [vmem:[%s2] sm:$0xff]
    %v623 = vld [vmem:[%s3] sm:$0xff]
    %v624 = vadd.f32 %v560, %v580
    %v625 = vadd.f32 %v624, %v600
    %v626 = vadd.f32 %v625, %v620
    %627 = vadd.xlane.f32.xlu0 %v626
    %v628 = vpop.xlane.xlu0 %627
    %v629 = vmul.f32 %v628, 0.001953125
    %v630 = vsub.f32 %v560, %v629
    %v631 = vsub.f32 %v580, %v629
    %v632 = vsub.f32 %v600, %v629
    %v633 = vsub.f32 %v620, %v629
    %v634 = vmul.f32 %v630, %v630
    %v635 = vmul.f32 %v631, %v631
    %v636 = vmul.f32 %v632, %v632
    %v637 = vmul.f32 %v633, %v633
    %v638 = vadd.f32 %v634, %v635
    %v639 = vadd.f32 %v638, %v636
    %v640 = vadd.f32 %v639, %v637
    %641 = vadd.xlane.f32.xlu0 %v640
    %v642 = vpop.xlane.xlu0 %641
    %v643 = vmul.f32 %v642, 0.001953125
    %v644 = vadd.f32 %v643, 1e-05
    %v645 = vrsqrt.pop %v644
    %v646 = vmul.f32 %v645, %v644
    %v647 = vmul.f32 %v646, %v645
    %v648 = vmul.f32 0.5, %v647
    %v649 = vsub.f32 1.5, %v648
    %v650 = vmul.f32 %v645, %v649
    %vm651 = vweird.f32 %v644
    %vm652 = vweird.f32 %v645
    %vm653 = vmor %vm651, %vm652
    %v654 = vsel %vm653, %v645, %v650
    %v655 = vmul.f32 %v622, %v654
    %657 = vset.pattern.permute.xlu0 0
    %658 = vperm.xlu0 %657, %v655
    %v659 = vpop.permute.xlu0 %658
    %v661 = vmul.f32 %v630, %v659
    %v662 = vmul.f32 %v631, %v659
    %v663 = vmul.f32 %v632, %v659
    %v664 = vmul.f32 %v633, %v659
    %666 = vset.pattern.permute.xlu0 0
    %667 = vperm.xlu0 %666, %v623
    %v668 = vpop.permute.xlu0 %667
    %v670 = vadd.f32 %v661, %v668
    %v671 = vadd.f32 %v662, %v668
    %v672 = vadd.f32 %v663, %v668
    %v673 = vadd.f32 %v664, %v668
    %v674 = vmul.f32 %v670, 0.5
    %v675 = vmul.f32 %v671, 0.5
    %v676 = vmul.f32 %v672, 0.5
    %v677 = vmul.f32 %v673, 0.5
    %v678 = vmul.f32 %v670, 0.70710677
    %v679 = vmul.f32 %v671, 0.70710677
    %v680 = vmul.f32 %v672, 0.70710677
    %v681 = vmul.f32 %v673, 0.70710677
    %v682 = vand.u32 2147483647, %v678
    %v683 = vand.u32 2147483647, %v679
    %v684 = vand.u32 2147483647, %v680
    %v685 = vand.u32 2147483647, %v681
    %v686 = vmul.f32 %v682, 0.3275911
    %v687 = vmul.f32 %v683, 0.3275911
    %v688 = vmul.f32 %v684, 0.3275911
    %v689 = vmul.f32 %v685, 0.3275911
    %v690 = vadd.f32 %v686, 1.0
    %v691 = vadd.f32 %v687, 1.0
    %v692 = vadd.f32 %v688, 1.0
    %v693 = vadd.f32 %v689, 1.0
    %v694 = vrcp.pop %v690
    %v695 = vmul.f32 %v690, %v694
    %v696 = vsub.f32 1.0, %v695
    %v697 = vmul.f32 %v694, %v696
    %v698 = vadd.f32 %v694, %v697
    %vm699 = vweird.f32 %v690
    %vm700 = vweird.f32 %v694
    %vm701 = vmor %vm699, %vm700
    %v702 = vsel %vm701, %v694, %v698
    %v703 = vand.u32 2147483647, %v690
    %vm704 = vcmp.eq.f32.partialorder %v703, 8.507059e+37
    %v705 = vand.u32 %v690, 2147483648
    %v706 = vor.u32 1.1754944e-38, %v705
    %v707 = vsel %vm704, %v706, %v702
    %v708 = vmul.f32 1.0, %v707
    %v709 = vrcp.pop %v691
    %v710 = vmul.f32 %v691, %v709
    %v711 = vsub.f32 1.0, %v710
    %v712 = vmul.f32 %v709, %v711
    %v713 = vadd.f32 %v709, %v712
    %vm714 = vweird.f32 %v691
    %vm715 = vweird.f32 %v709
    %vm716 = vmor %vm714, %vm715
    %v717 = vsel %vm716, %v709, %v713
    %v718 = vand.u32 2147483647, %v691
    %vm719 = vcmp.eq.f32.partialorder %v718, 8.507059e+37
    %v720 = vand.u32 %v691, 2147483648
    %v721 = vor.u32 1.1754944e-38, %v720
    %v722 = vsel %vm719, %v721, %v717
    %v723 = vmul.f32 1.0, %v722
    %v724 = vrcp.pop %v692
    %v725 = vmul.f32 %v692, %v724
    %v726 = vsub.f32 1.0, %v725
    %v727 = vmul.f32 %v724, %v726
    %v728 = vadd.f32 %v724, %v727
    %vm729 = vweird.f32 %v692
    %vm730 = vweird.f32 %v724
    %vm731 = vmor %vm729, %vm730
    %v732 = vsel %vm731, %v724, %v728
    %v733 = vand.u32 2147483647, %v692
    %vm734 = vcmp.eq.f32.partialorder %v733, 8.507059e+37
    %v735 = vand.u32 %v692, 2147483648
    %v736 = vor.u32 1.1754944e-38, %v735
    %v737 = vsel %vm734, %v736, %v732
    %v738 = vmul.f32 1.0, %v737
    %v739 = vrcp.pop %v693
    %v740 = vmul.f32 %v693, %v739
    %v741 = vsub.f32 1.0, %v740
    %v742 = vmul.f32 %v739, %v741
    %v743 = vadd.f32 %v739, %v742
    %vm744 = vweird.f32 %v693
    %vm745 = vweird.f32 %v739
    %vm746 = vmor %vm744, %vm745
    %v747 = vsel %vm746, %v739, %v743
    %v748 = vand.u32 2147483647, %v693
    %vm749 = vcmp.eq.f32.partialorder %v748, 8.507059e+37
    %v750 = vand.u32 %v693, 2147483648
    %v751 = vor.u32 1.1754944e-38, %v750
    %v752 = vsel %vm749, %v751, %v747
    %v753 = vmul.f32 1.0, %v752
    %v754 = vmul.f32 %v708, 1.0614054
    %v755 = vmul.f32 %v723, 1.0614054
    %v756 = vmul.f32 %v738, 1.0614054
    %v757 = vmul.f32 %v753, 1.0614054
    %v758 = vadd.f32 %v754, -1.4531521
    %v759 = vadd.f32 %v755, -1.4531521
    %v760 = vadd.f32 %v756, -1.4531521
    %v761 = vadd.f32 %v757, -1.4531521
    %v762 = vmul.f32 %v758, %v708
    %v763 = vmul.f32 %v759, %v723
    %v764 = vmul.f32 %v760, %v738
    %v765 = vmul.f32 %v761, %v753
    %v766 = vadd.f32 %v762, 1.4214138
    %v767 = vadd.f32 %v763, 1.4214138
    %v768 = vadd.f32 %v764, 1.4214138
    %v769 = vadd.f32 %v765, 1.4214138
    %v770 = vmul.f32 %v766, %v708
    %v771 = vmul.f32 %v767, %v723
    %v772 = vmul.f32 %v768, %v738
    %v773 = vmul.f32 %v769, %v753
    %v774 = vadd.f32 %v770, -0.28449672
    %v775 = vadd.f32 %v771, -0.28449672
    %v776 = vadd.f32 %v772, -0.28449672
    %v777 = vadd.f32 %v773, -0.28449672
    %v778 = vmul.f32 %v774, %v708
    %v779 = vmul.f32 %v775, %v723
    %v780 = vmul.f32 %v776, %v738
    %v781 = vmul.f32 %v777, %v753
    %v782 = vadd.f32 %v778, 0.2548296
    %v783 = vadd.f32 %v779, 0.2548296
    %v784 = vadd.f32 %v780, 0.2548296
    %v785 = vadd.f32 %v781, 0.2548296
    %v786 = vmul.f32 %v782, %v708
    %v787 = vmul.f32 %v783, %v723
    %v788 = vmul.f32 %v784, %v738
    %v789 = vmul.f32 %v785, %v753
    %v790 = vsub.f32 0.0, %v682
    %v791 = vsub.f32 0.0, %v683
    %v792 = vsub.f32 0.0, %v684
    %v793 = vsub.f32 0.0, %v685
    %v794 = vmul.f32 %v790, %v682
    %v795 = vmul.f32 %v791, %v683
    %v796 = vmul.f32 %v792, %v684
    %v797 = vmul.f32 %v793, %v685
    %v798 = vmul.f32 %v794, 1.442695
    %v799 = vpow.pop %v798
    %v800 = vmul.f32 %v795, 1.442695
    %v801 = vpow.pop %v800
    %v802 = vmul.f32 %v796, 1.442695
    %v803 = vpow.pop %v802
    %v804 = vmul.f32 %v797, 1.442695
    %v805 = vpow.pop %v804
    %v806 = vmul.f32 %v786, %v799
    %v807 = vmul.f32 %v787, %v801
    %v808 = vmul.f32 %v788, %v803
    %v809 = vmul.f32 %v789, %v805
    %v810 = vsub.f32 1.0, %v806
    %v811 = vsub.f32 1.0, %v807
    %v812 = vsub.f32 1.0, %v808
    %v813 = vsub.f32 1.0, %v809
    %vm814 = vcmp.ge.f32.partialorder %v678, 0.0
    %vm815 = vcmp.ge.f32.partialorder %v679, 0.0
    %vm816 = vcmp.ge.f32.partialorder %v680, 0.0
    %vm817 = vcmp.ge.f32.partialorder %v681, 0.0
    %v818 = vsub.f32 0.0, %v810
    %v819 = vsub.f32 0.0, %v811
    %v820 = vsub.f32 0.0, %v812
    %v821 = vsub.f32 0.0, %v813
    %v822 = vsel %vm814, %v810, %v818
    %v823 = vsel %vm815, %v811, %v819
    %v824 = vsel %vm816, %v812, %v820
    %v825 = vsel %vm817, %v813, %v821
    %v826 = vadd.f32 %v822, 1.0
    %v827 = vadd.f32 %v823, 1.0
    %v828 = vadd.f32 %v824, 1.0
    %v829 = vadd.f32 %v825, 1.0
    %v830 = vmul.f32 %v674, %v826
    %v831 = vmul.f32 %v675, %v827
    %v832 = vmul.f32 %v676, %v828
    %v833 = vmul.f32 %v677, %v829
    %834 = vst [vmem:[#allocation3] sm:$0xff] 0.0
    %835 = vst [vmem:[#allocation3 + $0x20] sm:$0xff] 0.0
    %836 = vst [vmem:[#allocation3 + $0x18] sm:$0xff] 0.0
    %837 = vst [vmem:[#allocation3 + $0x38] sm:$0xff] 0.0
    %838 = vst [vmem:[#allocation3 + $0x8] sm:$0xff] %v830
    %839 = vst [vmem:[#allocation3 + $0x10] sm:$0xff] %v831
    %s840 = scalar_lea.vmem [#allocation3], 32
    %841 = vst [vmem:[%s840 + $0x8] sm:$0xff] %v832
    %842 = vst [vmem:[%s840 + $0x10] sm:$0xff] %v833
    %v843 = vld [vmem:[#allocation3] sm:$0xff]
    %v844 = vld [vmem:[#allocation3 + $0x8] sm:$0xff]
    %v845 = vld [vmem:[#allocation3 + $0x10] sm:$0xff]
    %846 = vrot.lane.b32.xlu0 %v51, 111
    %v847 = vpop.permute.xlu0 %846
    %848 = vrot.lane.b32.xlu0 %v52, 111
    %v849 = vpop.permute.xlu0 %848
    %v850 = vsel %vm59, %v847, %v849
    %v854 = vmul.f32 %v843, %v847
    %v855 = vmul.f32 %v844, %v850
    %v856 = vmul.f32 %v845, %v849
    %860 = vrot.lane.b32.xlu0 %v854, 17
    %v861 = vpop.permute.xlu0 %860
    %862 = vrot.lane.b32.xlu0 %v855, 17
    %v863 = vpop.permute.xlu0 %862
    %864 = vrot.lane.b32.xlu0 %v856, 17
    %v865 = vpop.permute.xlu0 %864
    %v866 = vsel %vm79, %v861, %v863
    %v867 = vsel %vm79, %v863, %v865
    %870 = vst [vmem:[#allocation5] sm:$0xff] %v866
    %871 = vst [vmem:[#allocation5 + $0x8] sm:$0xff] %v867
    %v872 = vld [vmem:[#allocation3] sm:$0xff]
    %v873 = vld [vmem:[#allocation3 + $0x8] sm:$0xff]
    %v874 = vld [vmem:[#allocation3 + $0x10] sm:$0xff]
    %878 = vrot.lane.b32.xlu0 %v872, 16
    %v879 = vpop.permute.xlu0 %878
    %880 = vrot.lane.b32.xlu0 %v873, 16
    %v881 = vpop.permute.xlu0 %880
    %882 = vrot.lane.b32.xlu0 %v874, 16
    %v883 = vpop.permute.xlu0 %882
    %v884 = vsel %vm103, %v879, %v881
    %v885 = vsel %vm103, %v881, %v883
    %888 = vst [vmem:[#allocation5 + $0x20] sm:$0xff] %v884
    %889 = vst [vmem:[#allocation5 + $0x28] sm:$0xff] %v885
    %v890 = vld [vmem:[#allocation3] sm:$0xff]
    %v891 = vld [vmem:[#allocation3 + $0x8] sm:$0xff]
    %v892 = vld [vmem:[#allocation3 + $0x10] sm:$0xff]
    %893 = vrot.lane.b32.xlu0 %v113, 113
    %v894 = vpop.permute.xlu0 %893
    %895 = vrot.lane.b32.xlu0 %v114, 113
    %v896 = vpop.permute.xlu0 %895
    %v897 = vsel %vm120, %v894, %v896
    %v901 = vmul.f32 %v890, %v894
    %v902 = vmul.f32 %v891, %v897
    %v903 = vmul.f32 %v892, %v896
    %907 = vrot.lane.b32.xlu0 %v901, 15
    %v908 = vpop.permute.xlu0 %907
    %909 = vrot.lane.b32.xlu0 %v902, 15
    %v910 = vpop.permute.xlu0 %909
    %911 = vrot.lane.b32.xlu0 %v903, 15
    %v912 = vpop.permute.xlu0 %911
    %v913 = vsel %vm140, %v908, %v910
    %v914 = vsel %vm140, %v910, %v912
    %917 = vst [vmem:[#allocation5 + $0x40] sm:$0xff] %v913
    %918 = vst [vmem:[#allocation5 + $0x48] sm:$0xff] %v914
    %v919 = vld [vmem:[#allocation3] sm:$0xff]
    %v920 = vld [vmem:[#allocation3 + $0x8] sm:$0xff]
    %v921 = vld [vmem:[#allocation3 + $0x10] sm:$0xff]
    %922 = vrot.lane.b32.xlu0 %v51, 127
    %v923 = vpop.permute.xlu0 %922
    %924 = vrot.lane.b32.xlu0 %v52, 127
    %v925 = vpop.permute.xlu0 %924
    %v926 = vsel %vm152, %v923, %v925
    %v930 = vmul.f32 %v919, %v923
    %v931 = vmul.f32 %v920, %v926
    %v932 = vmul.f32 %v921, %v925
    %936 = vrot.lane.b32.xlu0 %v930, 1
    %v937 = vpop.permute.xlu0 %936
    %938 = vrot.lane.b32.xlu0 %v931, 1
    %v939 = vpop.permute.xlu0 %938
    %940 = vrot.lane.b32.xlu0 %v932, 1
    %v941 = vpop.permute.xlu0 %940
    %v942 = vsel %vm173, %v937, %v939
    %v943 = vsel %vm173, %v939, %v941
    %946 = vst [vmem:[#allocation5 + $0x60] sm:$0xff] %v942
    %947 = vst [vmem:[#allocation5 + $0x68] sm:$0xff] %v943
    %v948 = vld [vmem:[#allocation3 + $0x8] sm:$0xff]
    %v949 = vld [vmem:[#allocation3 + $0x10] sm:$0xff]
    %950 = vst [vmem:[#allocation5 + $0x80] sm:$0xff] %v948
    %951 = vst [vmem:[#allocation5 + $0x88] sm:$0xff] %v949
    %v952 = vld [vmem:[#allocation3 + $0x8] sm:$0xff]
    %v953 = vld [vmem:[#allocation3 + $0x10] sm:$0xff]
    %v954 = vld [vmem:[#allocation3 + $0x18] sm:$0xff]
    %955 = vrot.lane.b32.xlu0 %v113, 1
    %v956 = vpop.permute.xlu0 %955
    %957 = vrot.lane.b32.xlu0 %v114, 1
    %v958 = vpop.permute.xlu0 %957
    %v959 = vsel %vm173, %v956, %v958
    %v963 = vmul.f32 %v952, %v956
    %v964 = vmul.f32 %v953, %v959
    %v965 = vmul.f32 %v954, %v958
    %969 = vrot.lane.b32.xlu0 %v963, 127
    %v970 = vpop.permute.xlu0 %969
    %971 = vrot.lane.b32.xlu0 %v964, 127
    %v972 = vpop.permute.xlu0 %971
    %973 = vrot.lane.b32.xlu0 %v965, 127
    %v974 = vpop.permute.xlu0 %973
    %v975 = vsel %vm152, %v970, %v972
    %v976 = vsel %vm152, %v972, %v974
    %979 = vst [vmem:[#allocation5 + $0xa0] sm:$0xff] %v975
    %980 = vst [vmem:[#allocation5 + $0xa8] sm:$0xff] %v976
    %v981 = vld [vmem:[#allocation3 + $0x8] sm:$0xff]
    %v982 = vld [vmem:[#allocation3 + $0x10] sm:$0xff]
    %v983 = vld [vmem:[#allocation3 + $0x18] sm:$0xff]
    %984 = vrot.lane.b32.xlu0 %v51, 15
    %v985 = vpop.permute.xlu0 %984
    %986 = vrot.lane.b32.xlu0 %v52, 15
    %v987 = vpop.permute.xlu0 %986
    %v988 = vsel %vm140, %v985, %v987
    %v992 = vmul.f32 %v981, %v985
    %v993 = vmul.f32 %v982, %v988
    %v994 = vmul.f32 %v983, %v987
    %998 = vrot.lane.b32.xlu0 %v992, 113
    %v999 = vpop.permute.xlu0 %998
    %1000 = vrot.lane.b32.xlu0 %v993, 113
    %v1001 = vpop.permute.xlu0 %1000
    %1002 = vrot.lane.b32.xlu0 %v994, 113
    %v1003 = vpop.permute.xlu0 %1002
    %v1004 = vsel %vm120, %v999, %v1001
    %v1005 = vsel %vm120, %v1001, %v1003
    %1008 = vst [vmem:[#allocation5 + $0xc0] sm:$0xff] %v1004
    %1009 = vst [vmem:[#allocation5 + $0xc8] sm:$0xff] %v1005
    %v1010 = vld [vmem:[#allocation3 + $0x8] sm:$0xff]
    %v1011 = vld [vmem:[#allocation3 + $0x10] sm:$0xff]
    %v1012 = vld [vmem:[#allocation3 + $0x18] sm:$0xff]
    %1016 = vrot.lane.b32.xlu0 %v1010, 112
    %v1017 = vpop.permute.xlu0 %1016
    %1018 = vrot.lane.b32.xlu0 %v1011, 112
    %v1019 = vpop.permute.xlu0 %1018
    %1020 = vrot.lane.b32.xlu0 %v1012, 112
    %v1021 = vpop.permute.xlu0 %1020
    %v1022 = vsel %vm267, %v1017, %v1019
    %v1023 = vsel %vm267, %v1019, %v1021
    %1026 = vst [vmem:[#allocation5 + $0xe0] sm:$0xff] %v1022
    %1027 = vst [vmem:[#allocation5 + $0xe8] sm:$0xff] %v1023
    %v1028 = vld [vmem:[#allocation3 + $0x8] sm:$0xff]
    %v1029 = vld [vmem:[#allocation3 + $0x10] sm:$0xff]
    %v1030 = vld [vmem:[#allocation3 + $0x18] sm:$0xff]
    %1031 = vrot.lane.b32.xlu0 %v113, 17
    %v1032 = vpop.permute.xlu0 %1031
    %1033 = vrot.lane.b32.xlu0 %v114, 17
    %v1034 = vpop.permute.xlu0 %1033
    %v1035 = vsel %vm79, %v1032, %v1034
    %v1039 = vmul.f32 %v1028, %v1032
    %v1040 = vmul.f32 %v1029, %v1035
    %v1041 = vmul.f32 %v1030, %v1034
    %1045 = vrot.lane.b32.xlu0 %v1039, 111
    %v1046 = vpop.permute.xlu0 %1045
    %1047 = vrot.lane.b32.xlu0 %v1040, 111
    %v1048 = vpop.permute.xlu0 %1047
    %1049 = vrot.lane.b32.xlu0 %v1041, 111
    %v1050 = vpop.permute.xlu0 %1049
    %v1051 = vsel %vm59, %v1046, %v1048
    %v1052 = vsel %vm59, %v1048, %v1050
    %1055 = vst [vmem:[#allocation5 + $0x100] sm:$0xff] %v1051
    %1056 = vst [vmem:[#allocation5 + $0x108] sm:$0xff] %v1052
    %v1057 = vld [vmem:[%s840] sm:$0xff]
    %v1058 = vld [vmem:[%s840 + $0x8] sm:$0xff]
    %v1059 = vld [vmem:[%s840 + $0x10] sm:$0xff]
    %v1060 = vmul.f32 %v1057, %v847
    %v1061 = vmul.f32 %v1058, %v850
    %v1062 = vmul.f32 %v1059, %v849
    %1066 = vrot.lane.b32.xlu0 %v1060, 17
    %v1067 = vpop.permute.xlu0 %1066
    %1068 = vrot.lane.b32.xlu0 %v1061, 17
    %v1069 = vpop.permute.xlu0 %1068
    %1070 = vrot.lane.b32.xlu0 %v1062, 17
    %v1071 = vpop.permute.xlu0 %1070
    %v1072 = vsel %vm79, %v1067, %v1069
    %v1073 = vsel %vm79, %v1069, %v1071
    %1076 = vst [vmem:[#allocation5 + $0x10] sm:$0xff] %v1072
    %1077 = vst [vmem:[#allocation5 + $0x18] sm:$0xff] %v1073
    %v1078 = vld [vmem:[%s840] sm:$0xff]
    %v1079 = vld [vmem:[%s840 + $0x8] sm:$0xff]
    %v1080 = vld [vmem:[%s840 + $0x10] sm:$0xff]
    %1084 = vrot.lane.b32.xlu0 %v1078, 16
    %v1085 = vpop.permute.xlu0 %1084
    %1086 = vrot.lane.b32.xlu0 %v1079, 16
    %v1087 = vpop.permute.xlu0 %1086
    %1088 = vrot.lane.b32.xlu0 %v1080, 16
    %v1089 = vpop.permute.xlu0 %1088
    %v1090 = vsel %vm103, %v1085, %v1087
    %v1091 = vsel %vm103, %v1087, %v1089
    %1094 = vst [vmem:[#allocation5 + $0x30] sm:$0xff] %v1090
    %1095 = vst [vmem:[#allocation5 + $0x38] sm:$0xff] %v1091
    %v1096 = vld [vmem:[%s840] sm:$0xff]
    %v1097 = vld [vmem:[%s840 + $0x8] sm:$0xff]
    %v1098 = vld [vmem:[%s840 + $0x10] sm:$0xff]
    %v1099 = vmul.f32 %v1096, %v894
    %v1100 = vmul.f32 %v1097, %v897
    %v1101 = vmul.f32 %v1098, %v896
    %1105 = vrot.lane.b32.xlu0 %v1099, 15
    %v1106 = vpop.permute.xlu0 %1105
    %1107 = vrot.lane.b32.xlu0 %v1100, 15
    %v1108 = vpop.permute.xlu0 %1107
    %1109 = vrot.lane.b32.xlu0 %v1101, 15
    %v1110 = vpop.permute.xlu0 %1109
    %v1111 = vsel %vm140, %v1106, %v1108
    %v1112 = vsel %vm140, %v1108, %v1110
    %1115 = vst [vmem:[#allocation5 + $0x50] sm:$0xff] %v1111
    %1116 = vst [vmem:[#allocation5 + $0x58] sm:$0xff] %v1112
    %v1117 = vld [vmem:[%s840] sm:$0xff]
    %v1118 = vld [vmem:[%s840 + $0x8] sm:$0xff]
    %v1119 = vld [vmem:[%s840 + $0x10] sm:$0xff]
    %v1120 = vmul.f32 %v1117, %v923
    %v1121 = vmul.f32 %v1118, %v926
    %v1122 = vmul.f32 %v1119, %v925
    %1126 = vrot.lane.b32.xlu0 %v1120, 1
    %v1127 = vpop.permute.xlu0 %1126
    %1128 = vrot.lane.b32.xlu0 %v1121, 1
    %v1129 = vpop.permute.xlu0 %1128
    %1130 = vrot.lane.b32.xlu0 %v1122, 1
    %v1131 = vpop.permute.xlu0 %1130
    %v1132 = vsel %vm173, %v1127, %v1129
    %v1133 = vsel %vm173, %v1129, %v1131
    %1136 = vst [vmem:[#allocation5 + $0x70] sm:$0xff] %v1132
    %1137 = vst [vmem:[#allocation5 + $0x78] sm:$0xff] %v1133
    %v1138 = vld [vmem:[%s840 + $0x8] sm:$0xff]
    %v1139 = vld [vmem:[%s840 + $0x10] sm:$0xff]
    %1140 = vst [vmem:[#allocation5 + $0x90] sm:$0xff] %v1138
    %1141 = vst [vmem:[#allocation5 + $0x98] sm:$0xff] %v1139
    %v1142 = vld [vmem:[%s840 + $0x8] sm:$0xff]
    %v1143 = vld [vmem:[%s840 + $0x10] sm:$0xff]
    %v1144 = vld [vmem:[%s840 + $0x18] sm:$0xff]
    %v1145 = vmul.f32 %v1142, %v956
    %v1146 = vmul.f32 %v1143, %v959
    %v1147 = vmul.f32 %v1144, %v958
    %1151 = vrot.lane.b32.xlu0 %v1145, 127
    %v1152 = vpop.permute.xlu0 %1151
    %1153 = vrot.lane.b32.xlu0 %v1146, 127
    %v1154 = vpop.permute.xlu0 %1153
    %1155 = vrot.lane.b32.xlu0 %v1147, 127
    %v1156 = vpop.permute.xlu0 %1155
    %v1157 = vsel %vm152, %v1152, %v1154
    %v1158 = vsel %vm152, %v1154, %v1156
    %1161 = vst [vmem:[#allocation5 + $0xb0] sm:$0xff] %v1157
    %1162 = vst [vmem:[#allocation5 + $0xb8] sm:$0xff] %v1158
    %v1163 = vld [vmem:[%s840 + $0x8] sm:$0xff]
    %v1164 = vld [vmem:[%s840 + $0x10] sm:$0xff]
    %v1165 = vld [vmem:[%s840 + $0x18] sm:$0xff]
    %v1166 = vmul.f32 %v1163, %v985
    %v1167 = vmul.f32 %v1164, %v988
    %v1168 = vmul.f32 %v1165, %v987
    %1172 = vrot.lane.b32.xlu0 %v1166, 113
    %v1173 = vpop.permute.xlu0 %1172
    %1174 = vrot.lane.b32.xlu0 %v1167, 113
    %v1175 = vpop.permute.xlu0 %1174
    %1176 = vrot.lane.b32.xlu0 %v1168, 113
    %v1177 = vpop.permute.xlu0 %1176
    %v1178 = vsel %vm120, %v1173, %v1175
    %v1179 = vsel %vm120, %v1175, %v1177
    %1182 = vst [vmem:[#allocation5 + $0xd0] sm:$0xff] %v1178
    %1183 = vst [vmem:[#allocation5 + $0xd8] sm:$0xff] %v1179
    %v1184 = vld [vmem:[%s840 + $0x8] sm:$0xff]
    %v1185 = vld [vmem:[%s840 + $0x10] sm:$0xff]
    %v1186 = vld [vmem:[%s840 + $0x18] sm:$0xff]
    %1190 = vrot.lane.b32.xlu0 %v1184, 112
    %v1191 = vpop.permute.xlu0 %1190
    %1192 = vrot.lane.b32.xlu0 %v1185, 112
    %v1193 = vpop.permute.xlu0 %1192
    %1194 = vrot.lane.b32.xlu0 %v1186, 112
    %v1195 = vpop.permute.xlu0 %1194
    %v1196 = vsel %vm267, %v1191, %v1193
    %v1197 = vsel %vm267, %v1193, %v1195
    %1200 = vst [vmem:[#allocation5 + $0xf0] sm:$0xff] %v1196
    %1201 = vst [vmem:[#allocation5 + $0xf8] sm:$0xff] %v1197
    %v1202 = vld [vmem:[%s840 + $0x8] sm:$0xff]
    %v1203 = vld [vmem:[%s840 + $0x10] sm:$0xff]
    %v1204 = vld [vmem:[%s840 + $0x18] sm:$0xff]
    %v1205 = vmul.f32 %v1202, %v1032
    %v1206 = vmul.f32 %v1203, %v1035
    %v1207 = vmul.f32 %v1204, %v1034
    %1211 = vrot.lane.b32.xlu0 %v1205, 111
    %v1212 = vpop.permute.xlu0 %1211
    %1213 = vrot.lane.b32.xlu0 %v1206, 111
    %v1214 = vpop.permute.xlu0 %1213
    %1215 = vrot.lane.b32.xlu0 %v1207, 111
    %v1216 = vpop.permute.xlu0 %1215
    %v1217 = vsel %vm59, %v1212, %v1214
    %v1218 = vsel %vm59, %v1214, %v1216
    %1221 = vst [vmem:[#allocation5 + $0x110] sm:$0xff] %v1217
    %1222 = vst [vmem:[#allocation5 + $0x118] sm:$0xff] %v1218
    %v1223 = vld [vmem:[%s4] sm:$0xff]
    %v1224 = vld [vmem:[#allocation5] sm:$0xff]
    %v1225 = vld [vmem:[#allocation5 + $0x8] sm:$0xff]
    %v1226 = vld [vmem:[#allocation5 + $0x10] sm:$0xff]
    %v1227 = vld [vmem:[#allocation5 + $0x18] sm:$0xff]
    %v1228 = vld [vmem:[#allocation5 + $0x20] sm:$0xff]
    %v1229 = vld [vmem:[#allocation5 + $0x28] sm:$0xff]
    %v1230 = vld [vmem:[#allocation5 + $0x30] sm:$0xff]
    %v1231 = vld [vmem:[#allocation5 + $0x38] sm:$0xff]
    %v1232 = vld [vmem:[#allocation5 + $0x40] sm:$0xff]
    %v1233 = vld [vmem:[#allocation5 + $0x48] sm:$0xff]
    %v1234 = vld [vmem:[#allocation5 + $0x50] sm:$0xff]
    %v1235 = vld [vmem:[#allocation5 + $0x58] sm:$0xff]
    %v1236 = vld [vmem:[#allocation5 + $0x60] sm:$0xff]
    %v1237 = vld [vmem:[#allocation5 + $0x68] sm:$0xff]
    %v1238 = vld [vmem:[#allocation5 + $0x70] sm:$0xff]
    %v1239 = vld [vmem:[#allocation5 + $0x78] sm:$0xff]
    %v1240 = vld [vmem:[#allocation5 + $0x80] sm:$0xff]
    %v1241 = vld [vmem:[#allocation5 + $0x88] sm:$0xff]
    %v1242 = vld [vmem:[#allocation5 + $0x90] sm:$0xff]
    %v1243 = vld [vmem:[#allocation5 + $0x98] sm:$0xff]
    %v1244 = vld [vmem:[#allocation5 + $0xa0] sm:$0xff]
    %v1245 = vld [vmem:[#allocation5 + $0xa8] sm:$0xff]
    %v1246 = vld [vmem:[#allocation5 + $0xb0] sm:$0xff]
    %v1247 = vld [vmem:[#allocation5 + $0xb8] sm:$0xff]
    %v1248 = vld [vmem:[#allocation5 + $0xc0] sm:$0xff]
    %v1249 = vld [vmem:[#allocation5 + $0xc8] sm:$0xff]
    %v1250 = vld [vmem:[#allocation5 + $0xd0] sm:$0xff]
    %v1251 = vld [vmem:[#allocation5 + $0xd8] sm:$0xff]
    %v1252 = vld [vmem:[#allocation5 + $0xe0] sm:$0xff]
    %v1253 = vld [vmem:[#allocation5 + $0xe8] sm:$0xff]
    %v1254 = vld [vmem:[#allocation5 + $0xf0] sm:$0xff]
    %v1255 = vld [vmem:[#allocation5 + $0xf8] sm:$0xff]
    %v1256 = vld [vmem:[#allocation5 + $0x100] sm:$0xff]
    %v1257 = vld [vmem:[#allocation5 + $0x108] sm:$0xff]
    %v1258 = vld [vmem:[#allocation5 + $0x110] sm:$0xff]
    %v1259 = vld [vmem:[#allocation5 + $0x118] sm:$0xff]
    %vm1260 = vcmask 588800
    %v1262 = vsel %vm1260, %v1223, 0
    %1264 = vmatpush.msra.mxu0 0.0
    %1265 = vmatpush.msra.mxu0 0.0
    %1266 = vmatpush.msra.mxu0 0.0
    %1267 = vmatpush.msra.mxu0 0.0
    %1268 = vmatpush.msra.mxu0 0.0
    %1269 = vmatpush.msra.mxu0 0.0
    %1270 = vmatpush.msra.mxu0 0.0
    %1271 = vmatpush.msra.mxu0 %v1256
    %1272 = vmatpush.msra.mxu0 %v1252
    %1273 = vmatpush.msra.mxu0 %v1248
    %1274 = vmatpush.msra.mxu0 %v1244
    %1275 = vmatpush.msra.mxu0 %v1240
    %1276 = vmatpush.msra.mxu0 %v1236
    %1277 = vmatpush.msra.mxu0 %v1232
    %1278 = vmatpush.msra.mxu0 %v1228
    %1279 = vmatpush.msra.mxu0 %v1224
    %1280 = vmatmul.f32.gmra.mxu0 %v1262
    %v1281 = vpop.f32.mrf.mxu0
    %v1282 = vadd.f32 0.0, %v1281
    %1283 = vdwg.mxu0
    %1284 = vmatpush.msra.mxu0 0.0
    %1285 = vmatpush.msra.mxu0 0.0
    %1286 = vmatpush.msra.mxu0 0.0
    %1287 = vmatpush.msra.mxu0 0.0
    %1288 = vmatpush.msra.mxu0 0.0
    %1289 = vmatpush.msra.mxu0 0.0
    %1290 = vmatpush.msra.mxu0 0.0
    %1291 = vmatpush.msra.mxu0 %v1257
    %1292 = vmatpush.msra.mxu0 %v1253
    %1293 = vmatpush.msra.mxu0 %v1249
    %1294 = vmatpush.msra.mxu0 %v1245
    %1295 = vmatpush.msra.mxu0 %v1241
    %1296 = vmatpush.msra.mxu0 %v1237
    %1297 = vmatpush.msra.mxu0 %v1233
    %1298 = vmatpush.msra.mxu0 %v1229
    %1299 = vmatpush.msra.mxu0 %v1225
    %1300 = vmatmul.f32.gmra.mxu0 %v1262
    %v1301 = vpop.f32.mrf.mxu0
    %v1302 = vadd.f32 0.0, %v1301
    %1303 = vdwg.mxu0
    %1304 = vmatpush.msra.mxu0 0.0
    %1305 = vmatpush.msra.mxu0 0.0
    %1306 = vmatpush.msra.mxu0 0.0
    %1307 = vmatpush.msra.mxu0 0.0
    %1308 = vmatpush.msra.mxu0 0.0
    %1309 = vmatpush.msra.mxu0 0.0
    %1310 = vmatpush.msra.mxu0 0.0
    %1311 = vmatpush.msra.mxu0 %v1258
    %1312 = vmatpush.msra.mxu0 %v1254
    %1313 = vmatpush.msra.mxu0 %v1250
    %1314 = vmatpush.msra.mxu0 %v1246
    %1315 = vmatpush.msra.mxu0 %v1242
    %1316 = vmatpush.msra.mxu0 %v1238
    %1317 = vmatpush.msra.mxu0 %v1234
    %1318 = vmatpush.msra.mxu0 %v1230
    %1319 = vmatpush.msra.mxu0 %v1226
    %1320 = vmatmul.f32.gmra.mxu0 %v1262
    %v1321 = vpop.f32.mrf.mxu0
    %v1322 = vadd.f32 0.0, %v1321
    %1323 = vdwg.mxu0
    %1324 = vmatpush.msra.mxu0 0.0
    %1325 = vmatpush.msra.mxu0 0.0
    %1326 = vmatpush.msra.mxu0 0.0
    %1327 = vmatpush.msra.mxu0 0.0
    %1328 = vmatpush.msra.mxu0 0.0
    %1329 = vmatpush.msra.mxu0 0.0
    %1330 = vmatpush.msra.mxu0 0.0
    %1331 = vmatpush.msra.mxu0 %v1259
    %1332 = vmatpush.msra.mxu0 %v1255
    %1333 = vmatpush.msra.mxu0 %v1251
    %1334 = vmatpush.msra.mxu0 %v1247
    %1335 = vmatpush.msra.mxu0 %v1243
    %1336 = vmatpush.msra.mxu0 %v1239
    %1337 = vmatpush.msra.mxu0 %v1235
    %1338 = vmatpush.msra.mxu0 %v1231
    %1339 = vmatpush.msra.mxu0 %v1227
    %1340 = vmatmul.f32.gmra.mxu0 %v1262
    %v1341 = vpop.f32.mrf.mxu0
    %v1342 = vadd.f32 0.0, %v1341
    %1343 = vdwg.mxu0
    %v1344 = vld [vmem:[%s5] sm:$0xff]
    %v1345 = vld [vmem:[%s6] sm:$0xff]
    %v1346 = vadd.f32 %v1282, %v1302
    %v1347 = vadd.f32 %v1346, %v1322
    %v1348 = vadd.f32 %v1347, %v1342
    %1349 = vadd.xlane.f32.xlu0 %v1348
    %v1350 = vpop.xlane.xlu0 %1349
    %v1351 = vmul.f32 %v1350, 0.001953125
    %v1352 = vsub.f32 %v1282, %v1351
    %v1353 = vsub.f32 %v1302, %v1351
    %v1354 = vsub.f32 %v1322, %v1351
    %v1355 = vsub.f32 %v1342, %v1351
    %v1356 = vmul.f32 %v1352, %v1352
    %v1357 = vmul.f32 %v1353, %v1353
    %v1358 = vmul.f32 %v1354, %v1354
    %v1359 = vmul.f32 %v1355, %v1355
    %v1360 = vadd.f32 %v1356, %v1357
    %v1361 = vadd.f32 %v1360, %v1358
    %v1362 = vadd.f32 %v1361, %v1359
    %1363 = vadd.xlane.f32.xlu0 %v1362
    %v1364 = vpop.xlane.xlu0 %1363
    %v1365 = vmul.f32 %v1364, 0.001953125
    %v1366 = vadd.f32 %v1365, 1e-05
    %v1367 = vrsqrt.pop %v1366
    %v1368 = vmul.f32 %v1367, %v1366
    %v1369 = vmul.f32 %v1368, %v1367
    %v1370 = vmul.f32 0.5, %v1369
    %v1371 = vsub.f32 1.5, %v1370
    %v1372 = vmul.f32 %v1367, %v1371
    %vm1373 = vweird.f32 %v1366
    %vm1374 = vweird.f32 %v1367
    %vm1375 = vmor %vm1373, %vm1374
    %v1376 = vsel %vm1375, %v1367, %v1372
    %v1377 = vmul.f32 %v1344, %v1376
    %1379 = vset.pattern.permute.xlu0 0
    %1380 = vperm.xlu0 %1379, %v1377
    %v1381 = vpop.permute.xlu0 %1380
    %v1383 = vmul.f32 %v1352, %v1381
    %v1384 = vmul.f32 %v1353, %v1381
    %v1385 = vmul.f32 %v1354, %v1381
    %v1386 = vmul.f32 %v1355, %v1381
    %1388 = vset.pattern.permute.xlu0 0
    %1389 = vperm.xlu0 %1388, %v1345
    %v1390 = vpop.permute.xlu0 %1389
    %v1392 = vadd.f32 %v1383, %v1390
    %v1393 = vadd.f32 %v1384, %v1390
    %v1394 = vadd.f32 %v1385, %v1390
    %v1395 = vadd.f32 %v1386, %v1390
    %v1396 = vmul.f32 %v1392, 0.5
    %v1397 = vmul.f32 %v1393, 0.5
    %v1398 = vmul.f32 %v1394, 0.5
    %v1399 = vmul.f32 %v1395, 0.5
    %v1400 = vmul.f32 %v1392, 0.70710677
    %v1401 = vmul.f32 %v1393, 0.70710677
    %v1402 = vmul.f32 %v1394, 0.70710677
    %v1403 = vmul.f32 %v1395, 0.70710677
    %v1404 = vand.u32 2147483647, %v1400
    %v1405 = vand.u32 2147483647, %v1401
    %v1406 = vand.u32 2147483647, %v1402
    %v1407 = vand.u32 2147483647, %v1403
    %v1408 = vmul.f32 %v1404, 0.3275911
    %v1409 = vmul.f32 %v1405, 0.3275911
    %v1410 = vmul.f32 %v1406, 0.3275911
    %v1411 = vmul.f32 %v1407, 0.3275911
    %v1412 = vadd.f32 %v1408, 1.0
    %v1413 = vadd.f32 %v1409, 1.0
    %v1414 = vadd.f32 %v1410, 1.0
    %v1415 = vadd.f32 %v1411, 1.0
    %v1416 = vrcp.pop %v1412
    %v1417 = vmul.f32 %v1412, %v1416
    %v1418 = vsub.f32 1.0, %v1417
    %v1419 = vmul.f32 %v1416, %v1418
    %v1420 = vadd.f32 %v1416, %v1419
    %vm1421 = vweird.f32 %v1412
    %vm1422 = vweird.f32 %v1416
    %vm1423 = vmor %vm1421, %vm1422
    %v1424 = vsel %vm1423, %v1416, %v1420
    %v1425 = vand.u32 2147483647, %v1412
    %vm1426 = vcmp.eq.f32.partialorder %v1425, 8.507059e+37
    %v1427 = vand.u32 %v1412, 2147483648
    %v1428 = vor.u32 1.1754944e-38, %v1427
    %v1429 = vsel %vm1426, %v1428, %v1424
    %v1430 = vmul.f32 1.0, %v1429
    %v1431 = vrcp.pop %v1413
    %v1432 = vmul.f32 %v1413, %v1431
    %v1433 = vsub.f32 1.0, %v1432
    %v1434 = vmul.f32 %v1431, %v1433
    %v1435 = vadd.f32 %v1431, %v1434
    %vm1436 = vweird.f32 %v1413
    %vm1437 = vweird.f32 %v1431
    %vm1438 = vmor %vm1436, %vm1437
    %v1439 = vsel %vm1438, %v1431, %v1435
    %v1440 = vand.u32 2147483647, %v1413
    %vm1441 = vcmp.eq.f32.partialorder %v1440, 8.507059e+37
    %v1442 = vand.u32 %v1413, 2147483648
    %v1443 = vor.u32 1.1754944e-38, %v1442
    %v1444 = vsel %vm1441, %v1443, %v1439
    %v1445 = vmul.f32 1.0, %v1444
    %v1446 = vrcp.pop %v1414
    %v1447 = vmul.f32 %v1414, %v1446
    %v1448 = vsub.f32 1.0, %v1447
    %v1449 = vmul.f32 %v1446, %v1448
    %v1450 = vadd.f32 %v1446, %v1449
    %vm1451 = vweird.f32 %v1414
    %vm1452 = vweird.f32 %v1446
    %vm1453 = vmor %vm1451, %vm1452
    %v1454 = vsel %vm1453, %v1446, %v1450
    %v1455 = vand.u32 2147483647, %v1414
    %vm1456 = vcmp.eq.f32.partialorder %v1455, 8.507059e+37
    %v1457 = vand.u32 %v1414, 2147483648
    %v1458 = vor.u32 1.1754944e-38, %v1457
    %v1459 = vsel %vm1456, %v1458, %v1454
    %v1460 = vmul.f32 1.0, %v1459
    %v1461 = vrcp.pop %v1415
    %v1462 = vmul.f32 %v1415, %v1461
    %v1463 = vsub.f32 1.0, %v1462
    %v1464 = vmul.f32 %v1461, %v1463
    %v1465 = vadd.f32 %v1461, %v1464
    %vm1466 = vweird.f32 %v1415
    %vm1467 = vweird.f32 %v1461
    %vm1468 = vmor %vm1466, %vm1467
    %v1469 = vsel %vm1468, %v1461, %v1465
    %v1470 = vand.u32 2147483647, %v1415
    %vm1471 = vcmp.eq.f32.partialorder %v1470, 8.507059e+37
    %v1472 = vand.u32 %v1415, 2147483648
    %v1473 = vor.u32 1.1754944e-38, %v1472
    %v1474 = vsel %vm1471, %v1473, %v1469
    %v1475 = vmul.f32 1.0, %v1474
    %v1476 = vmul.f32 %v1430, 1.0614054
    %v1477 = vmul.f32 %v1445, 1.0614054
    %v1478 = vmul.f32 %v1460, 1.0614054
    %v1479 = vmul.f32 %v1475, 1.0614054
    %v1480 = vadd.f32 %v1476, -1.4531521
    %v1481 = vadd.f32 %v1477, -1.4531521
    %v1482 = vadd.f32 %v1478, -1.4531521
    %v1483 = vadd.f32 %v1479, -1.4531521
    %v1484 = vmul.f32 %v1480, %v1430
    %v1485 = vmul.f32 %v1481, %v1445
    %v1486 = vmul.f32 %v1482, %v1460
    %v1487 = vmul.f32 %v1483, %v1475
    %v1488 = vadd.f32 %v1484, 1.4214138
    %v1489 = vadd.f32 %v1485, 1.4214138
    %v1490 = vadd.f32 %v1486, 1.4214138
    %v1491 = vadd.f32 %v1487, 1.4214138
    %v1492 = vmul.f32 %v1488, %v1430
    %v1493 = vmul.f32 %v1489, %v1445
    %v1494 = vmul.f32 %v1490, %v1460
    %v1495 = vmul.f32 %v1491, %v1475
    %v1496 = vadd.f32 %v1492, -0.28449672
    %v1497 = vadd.f32 %v1493, -0.28449672
    %v1498 = vadd.f32 %v1494, -0.28449672
    %v1499 = vadd.f32 %v1495, -0.28449672
    %v1500 = vmul.f32 %v1496, %v1430
    %v1501 = vmul.f32 %v1497, %v1445
    %v1502 = vmul.f32 %v1498, %v1460
    %v1503 = vmul.f32 %v1499, %v1475
    %v1504 = vadd.f32 %v1500, 0.2548296
    %v1505 = vadd.f32 %v1501, 0.2548296
    %v1506 = vadd.f32 %v1502, 0.2548296
    %v1507 = vadd.f32 %v1503, 0.2548296
    %v1508 = vmul.f32 %v1504, %v1430
    %v1509 = vmul.f32 %v1505, %v1445
    %v1510 = vmul.f32 %v1506, %v1460
    %v1511 = vmul.f32 %v1507, %v1475
    %v1512 = vsub.f32 0.0, %v1404
    %v1513 = vsub.f32 0.0, %v1405
    %v1514 = vsub.f32 0.0, %v1406
    %v1515 = vsub.f32 0.0, %v1407
    %v1516 = vmul.f32 %v1512, %v1404
    %v1517 = vmul.f32 %v1513, %v1405
    %v1518 = vmul.f32 %v1514, %v1406
    %v1519 = vmul.f32 %v1515, %v1407
    %v1520 = vmul.f32 %v1516, 1.442695
    %v1521 = vpow.pop %v1520
    %v1522 = vmul.f32 %v1517, 1.442695
    %v1523 = vpow.pop %v1522
    %v1524 = vmul.f32 %v1518, 1.442695
    %v1525 = vpow.pop %v1524
    %v1526 = vmul.f32 %v1519, 1.442695
    %v1527 = vpow.pop %v1526
    %v1528 = vmul.f32 %v1508, %v1521
    %v1529 = vmul.f32 %v1509, %v1523
    %v1530 = vmul.f32 %v1510, %v1525
    %v1531 = vmul.f32 %v1511, %v1527
    %v1532 = vsub.f32 1.0, %v1528
    %v1533 = vsub.f32 1.0, %v1529
    %v1534 = vsub.f32 1.0, %v1530
    %v1535 = vsub.f32 1.0, %v1531
    %vm1536 = vcmp.ge.f32.partialorder %v1400, 0.0
    %vm1537 = vcmp.ge.f32.partialorder %v1401, 0.0
    %vm1538 = vcmp.ge.f32.partialorder %v1402, 0.0
    %vm1539 = vcmp.ge.f32.partialorder %v1403, 0.0
    %v1540 = vsub.f32 0.0, %v1532
    %v1541 = vsub.f32 0.0, %v1533
    %v1542 = vsub.f32 0.0, %v1534
    %v1543 = vsub.f32 0.0, %v1535
    %v1544 = vsel %vm1536, %v1532, %v1540
    %v1545 = vsel %vm1537, %v1533, %v1541
    %v1546 = vsel %vm1538, %v1534, %v1542
    %v1547 = vsel %vm1539, %v1535, %v1543
    %v1548 = vadd.f32 %v1544, 1.0
    %v1549 = vadd.f32 %v1545, 1.0
    %v1550 = vadd.f32 %v1546, 1.0
    %v1551 = vadd.f32 %v1547, 1.0
    %v1552 = vmul.f32 %v1396, %v1548
    %v1553 = vmul.f32 %v1397, %v1549
    %v1554 = vmul.f32 %v1398, %v1550
    %v1555 = vmul.f32 %v1399, %v1551
    %1556 = vst [vmem:[#allocation3 + $0x8] sm:$0xff] %v1552
    %1557 = vst [vmem:[#allocation3 + $0x10] sm:$0xff] %v1553
    %1558 = vst [vmem:[%s840 + $0x8] sm:$0xff] %v1554
    %1559 = vst [vmem:[%s840 + $0x10] sm:$0xff] %v1555
    %v1560 = vlaneseq
    %v1561 = vshrl.u32 %v1560, 7
    %v1562 = vadd.s32 %v1561, 8
    %v1563 = vadd.s32 %v1561, 16
    %v1564 = vadd.s32 %v1561, 24
    %v1565 = vadd.s32 %v1561, 32
    %v1566 = vadd.s32 %v1561, 40
    %v1567 = vadd.s32 %v1561, 48
    %v1568 = vadd.s32 %v1561, 56
    %v1569 = vadd.s32 %v1561, 64
    %v1570 = vadd.s32 %v1561, 72
    %v1571 = vadd.s32 %v1561, 80
    %v1572 = vadd.s32 %v1561, 88
    %v1573 = vadd.s32 %v1561, 96
    %v1574 = vadd.s32 %v1561, 104
    %v1575 = vadd.s32 %v1561, 112
    %v1576 = vadd.s32 %v1561, 120
    %v1577 = vadd.s32 %v1561, 128
    %v1578 = vadd.s32 %v1561, 136
    %v1579 = vadd.s32 %v1561, 144
    %v1580 = vadd.s32 %v1561, 152
    %v1581 = vadd.s32 %v1561, 160
    %v1582 = vadd.s32 %v1561, 168
    %v1583 = vadd.s32 %v1561, 176
    %v1584 = vadd.s32 %v1561, 184
    %v1585 = vadd.s32 %v1561, 192
    %v1586 = vadd.s32 %v1561, 200
    %v1587 = vadd.s32 %v1561, 208
    %v1588 = vadd.s32 %v1561, 216
    %v1589 = vadd.s32 %v1561, 224
    %v1590 = vadd.s32 %v1561, 232
    %v1591 = vadd.s32 %v1561, 240
    %v1592 = vadd.s32 %v1561, 248
    %v1593 = vld [vmem:[%s9] sm:$0x1]
    %v1594 = vperm.slane %v1593, 0
    %vm1595 = vcmp.eq.s32.totalorder %v1561, %v1594
    %vm1596 = vcmp.eq.s32.totalorder %v1562, %v1594
    %vm1597 = vcmp.eq.s32.totalorder %v1563, %v1594
    %vm1598 = vcmp.eq.s32.totalorder %v1564, %v1594
    %vm1599 = vcmp.eq.s32.totalorder %v1565, %v1594
    %vm1600 = vcmp.eq.s32.totalorder %v1566, %v1594
    %vm1601 = vcmp.eq.s32.totalorder %v1567, %v1594
    %vm1602 = vcmp.eq.s32.totalorder %v1568, %v1594
    %vm1603 = vcmp.eq.s32.totalorder %v1569, %v1594
    %vm1604 = vcmp.eq.s32.totalorder %v1570, %v1594
    %vm1605 = vcmp.eq.s32.totalorder %v1571, %v1594
    %vm1606 = vcmp.eq.s32.totalorder %v1572, %v1594
    %vm1607 = vcmp.eq.s32.totalorder %v1573, %v1594
    %vm1608 = vcmp.eq.s32.totalorder %v1574, %v1594
    %vm1609 = vcmp.eq.s32.totalorder %v1575, %v1594
    %vm1610 = vcmp.eq.s32.totalorder %v1576, %v1594
    %vm1611 = vcmp.eq.s32.totalorder %v1577, %v1594
    %vm1612 = vcmp.eq.s32.totalorder %v1578, %v1594
    %vm1613 = vcmp.eq.s32.totalorder %v1579, %v1594
    %vm1614 = vcmp.eq.s32.totalorder %v1580, %v1594
    %vm1615 = vcmp.eq.s32.totalorder %v1581, %v1594
    %vm1616 = vcmp.eq.s32.totalorder %v1582, %v1594
    %vm1617 = vcmp.eq.s32.totalorder %v1583, %v1594
    %vm1618 = vcmp.eq.s32.totalorder %v1584, %v1594
    %vm1619 = vcmp.eq.s32.totalorder %v1585, %v1594
    %vm1620 = vcmp.eq.s32.totalorder %v1586, %v1594
    %vm1621 = vcmp.eq.s32.totalorder %v1587, %v1594
    %vm1622 = vcmp.eq.s32.totalorder %v1588, %v1594
    %vm1623 = vcmp.eq.s32.totalorder %v1589, %v1594
    %vm1624 = vcmp.eq.s32.totalorder %v1590, %v1594
    %vm1625 = vcmp.eq.s32.totalorder %v1591, %v1594
    %vm1626 = vcmp.eq.s32.totalorder %v1592, %v1594
    %v1627 = vsel %vm1595, 1, 0
    %v1628 = vsel %vm1596, 1, 0
    %v1629 = vsel %vm1597, 1, 0
    %v1630 = vsel %vm1598, 1, 0
    %v1631 = vsel %vm1599, 1, 0
    %v1632 = vsel %vm1600, 1, 0
    %v1633 = vsel %vm1601, 1, 0
    %v1634 = vsel %vm1602, 1, 0
    %v1635 = vsel %vm1603, 1, 0
    %v1636 = vsel %vm1604, 1, 0
    %v1637 = vsel %vm1605, 1, 0
    %v1638 = vsel %vm1606, 1, 0
    %v1639 = vsel %vm1607, 1, 0
    %v1640 = vsel %vm1608, 1, 0
    %v1641 = vsel %vm1609, 1, 0
    %v1642 = vsel %vm1610, 1, 0
    %v1643 = vsel %vm1611, 1, 0
    %v1644 = vsel %vm1612, 1, 0
    %v1645 = vsel %vm1613, 1, 0
    %v1646 = vsel %vm1614, 1, 0
    %v1647 = vsel %vm1615, 1, 0
    %v1648 = vsel %vm1616, 1, 0
    %v1649 = vsel %vm1617, 1, 0
    %v1650 = vsel %vm1618, 1, 0
    %v1651 = vsel %vm1619, 1, 0
    %v1652 = vsel %vm1620, 1, 0
    %v1653 = vsel %vm1621, 1, 0
    %v1654 = vsel %vm1622, 1, 0
    %v1655 = vsel %vm1623, 1, 0
    %v1656 = vsel %vm1624, 1, 0
    %v1657 = vsel %vm1625, 1, 0
    %v1658 = vsel %vm1626, 1, 0
    %v1659 = vcvt.s32.f32 %v1627
    %v1660 = vcvt.s32.f32 %v1628
    %v1661 = vcvt.s32.f32 %v1629
    %v1662 = vcvt.s32.f32 %v1630
    %v1663 = vcvt.s32.f32 %v1631
    %v1664 = vcvt.s32.f32 %v1632
    %v1665 = vcvt.s32.f32 %v1633
    %v1666 = vcvt.s32.f32 %v1634
    %v1667 = vcvt.s32.f32 %v1635
    %v1668 = vcvt.s32.f32 %v1636
    %v1669 = vcvt.s32.f32 %v1637
    %v1670 = vcvt.s32.f32 %v1638
    %v1671 = vcvt.s32.f32 %v1639
    %v1672 = vcvt.s32.f32 %v1640
    %v1673 = vcvt.s32.f32 %v1641
    %v1674 = vcvt.s32.f32 %v1642
    %v1675 = vcvt.s32.f32 %v1643
    %v1676 = vcvt.s32.f32 %v1644
    %v1677 = vcvt.s32.f32 %v1645
    %v1678 = vcvt.s32.f32 %v1646
    %v1679 = vcvt.s32.f32 %v1647
    %v1680 = vcvt.s32.f32 %v1648
    %v1681 = vcvt.s32.f32 %v1649
    %v1682 = vcvt.s32.f32 %v1650
    %v1683 = vcvt.s32.f32 %v1651
    %v1684 = vcvt.s32.f32 %v1652
    %v1685 = vcvt.s32.f32 %v1653
    %v1686 = vcvt.s32.f32 %v1654
    %v1687 = vcvt.s32.f32 %v1655
    %v1688 = vcvt.s32.f32 %v1656
    %v1689 = vcvt.s32.f32 %v1657
    %v1690 = vcvt.s32.f32 %v1658
    %v1691 = vld [vmem:[#allocation3 + $0x8] sm:$0xff]
    %v1692 = vld [vmem:[#allocation3 + $0x10] sm:$0xff]
    %v1693 = vld [vmem:[#allocation3 + $0x18] sm:$0xff]
    %1697 = vrot.lane.b32.xlu0 %v1691, 127
    %v1698 = vpop.permute.xlu0 %1697
    %1699 = vrot.lane.b32.xlu0 %v1692, 127
    %v1700 = vpop.permute.xlu0 %1699
    %1701 = vrot.lane.b32.xlu0 %v1693, 127
    %v1702 = vpop.permute.xlu0 %1701
    %v1703 = vsel %vm152, %v1698, %v1700
    %v1704 = vsel %vm152, %v1700, %v1702
    %v1707 = vmax.f32 %v1691, %v1703
    %v1708 = vmax.f32 %v1692, %v1704
    %v1710 = vmax.f32 %v1693, %v1702
    %1714 = vrot.lane.b32.xlu0 %v1707, 112
    %v1715 = vpop.permute.xlu0 %1714
    %1716 = vrot.lane.b32.xlu0 %v1708, 112
    %v1717 = vpop.permute.xlu0 %1716
    %1718 = vrot.lane.b32.xlu0 %v1710, 112
    %v1719 = vpop.permute.xlu0 %1718
    %v1720 = vsel %vm267, %v1715, %v1717
    %v1721 = vsel %vm267, %v1717, %v1719
    %v1724 = vmax.f32 %v1707, %v1720
    %v1725 = vmax.f32 %v1708, %v1721
    %1726 = vmatpush.msra.mxu0 %v1674
    %1727 = vmatpush.msra.mxu0 %v1673
    %1728 = vmatpush.msra.mxu0 %v1672
    %1729 = vmatpush.msra.mxu0 %v1671
    %1730 = vmatpush.msra.mxu0 %v1670
    %1731 = vmatpush.msra.mxu0 %v1669
    %1732 = vmatpush.msra.mxu0 %v1668
    %1733 = vmatpush.msra.mxu0 %v1667
    %1734 = vmatpush.msra.mxu0 %v1666
    %1735 = vmatpush.msra.mxu0 %v1665
    %1736 = vmatpush.msra.mxu0 %v1664
    %1737 = vmatpush.msra.mxu0 %v1663
    %1738 = vmatpush.msra.mxu0 %v1662
    %1739 = vmatpush.msra.mxu0 %v1661
    %1740 = vmatpush.msra.mxu0 %v1660
    %1741 = vmatpush.msra.mxu0 %v1659
    %1742 = vmatmul.f32.gmra.mxu0 %v1724
    %v1743 = vpop.f32.mrf.mxu0
    %v1744 = vadd.f32 0.0, %v1743
    %1745 = vdwg.mxu0
    %1746 = vmatpush.msra.mxu0 %v1690
    %1747 = vmatpush.msra.mxu0 %v1689
    %1748 = vmatpush.msra.mxu0 %v1688
    %1749 = vmatpush.msra.mxu0 %v1687
    %1750 = vmatpush.msra.mxu0 %v1686
    %1751 = vmatpush.msra.mxu0 %v1685
    %1752 = vmatpush.msra.mxu0 %v1684
    %1753 = vmatpush.msra.mxu0 %v1683
    %1754 = vmatpush.msra.mxu0 %v1682
    %1755 = vmatpush.msra.mxu0 %v1681
    %1756 = vmatpush.msra.mxu0 %v1680
    %1757 = vmatpush.msra.mxu0 %v1679
    %1758 = vmatpush.msra.mxu0 %v1678
    %1759 = vmatpush.msra.mxu0 %v1677
    %1760 = vmatpush.msra.mxu0 %v1676
    %1761 = vmatpush.msra.mxu0 %v1675
    %1762 = vmatmul.f32.gmra.mxu0 %v1725
    %v1763 = vpop.f32.mrf.mxu0
    %v1764 = vadd.f32 %v1744, %v1763
    %1765 = vdwg.mxu0
    %vm1766 = vcmask 523264
    %1767 = vst.msk [vmem:[#allocation6] sm:$0xff] %vm1766, %v1764
    %v1768 = vld [vmem:[%s840 + $0x8] sm:$0xff]
    %v1769 = vld [vmem:[%s840 + $0x10] sm:$0xff]
    %v1770 = vld [vmem:[%s840 + $0x18] sm:$0xff]
    %1774 = vrot.lane.b32.xlu0 %v1768, 127
    %v1775 = vpop.permute.xlu0 %1774
    %1776 = vrot.lane.b32.xlu0 %v1769, 127
    %v1777 = vpop.permute.xlu0 %1776
    %1778 = vrot.lane.b32.xlu0 %v1770, 127
    %v1779 = vpop.permute.xlu0 %1778
    %v1780 = vsel %vm152, %v1775, %v1777
    %v1781 = vsel %vm152, %v1777, %v1779
    %v1784 = vmax.f32 %v1768, %v1780
    %v1785 = vmax.f32 %v1769, %v1781
    %v1787 = vmax.f32 %v1770, %v1779
    %1791 = vrot.lane.b32.xlu0 %v1784, 112
    %v1792 = vpop.permute.xlu0 %1791
    %1793 = vrot.lane.b32.xlu0 %v1785, 112
    %v1794 = vpop.permute.xlu0 %1793
    %1795 = vrot.lane.b32.xlu0 %v1787, 112
    %v1796 = vpop.permute.xlu0 %1795
    %v1797 = vsel %vm267, %v1792, %v1794
    %v1798 = vsel %vm267, %v1794, %v1796
    %v1801 = vmax.f32 %v1784, %v1797
    %v1802 = vmax.f32 %v1785, %v1798
    %1803 = vmatpush.msra.mxu0 %v1674
    %1804 = vmatpush.msra.mxu0 %v1673
    %1805 = vmatpush.msra.mxu0 %v1672
    %1806 = vmatpush.msra.mxu0 %v1671
    %1807 = vmatpush.msra.mxu0 %v1670
    %1808 = vmatpush.msra.mxu0 %v1669
    %1809 = vmatpush.msra.mxu0 %v1668
    %1810 = vmatpush.msra.mxu0 %v1667
    %1811 = vmatpush.msra.mxu0 %v1666
    %1812 = vmatpush.msra.mxu0 %v1665
    %1813 = vmatpush.msra.mxu0 %v1664
    %1814 = vmatpush.msra.mxu0 %v1663
    %1815 = vmatpush.msra.mxu0 %v1662
    %1816 = vmatpush.msra.mxu0 %v1661
    %1817 = vmatpush.msra.mxu0 %v1660
    %1818 = vmatpush.msra.mxu0 %v1659
    %1819 = vmatmul.f32.gmra.mxu0 %v1801
    %v1820 = vpop.f32.mrf.mxu0
    %v1821 = vadd.f32 0.0, %v1820
    %1822 = vdwg.mxu0
    %1823 = vmatpush.msra.mxu0 %v1690
    %1824 = vmatpush.msra.mxu0 %v1689
    %1825 = vmatpush.msra.mxu0 %v1688
    %1826 = vmatpush.msra.mxu0 %v1687
    %1827 = vmatpush.msra.mxu0 %v1686
    %1828 = vmatpush.msra.mxu0 %v1685
    %1829 = vmatpush.msra.mxu0 %v1684
    %1830 = vmatpush.msra.mxu0 %v1683
    %1831 = vmatpush.msra.mxu0 %v1682
    %1832 = vmatpush.msra.mxu0 %v1681
    %1833 = vmatpush.msra.mxu0 %v1680
    %1834 = vmatpush.msra.mxu0 %v1679
    %1835 = vmatpush.msra.mxu0 %v1678
    %1836 = vmatpush.msra.mxu0 %v1677
    %1837 = vmatpush.msra.mxu0 %v1676
    %1838 = vmatpush.msra.mxu0 %v1675
    %1839 = vmatmul.f32.gmra.mxu0 %v1802
    %v1840 = vpop.f32.mrf.mxu0
    %v1841 = vadd.f32 %v1821, %v1840
    %1842 = vdwg.mxu0
    %s1843 = scalar_lea.vmem [#allocation6], 8
    %1844 = vst.msk [vmem:[%s1843] sm:$0xff] %vm1766, %v1841
    // Predicated region
    $region42: #{tpu_custom_call.1} parent=1 // pred_check
      _
    $region43: #{tpu_custom_call.1} parent=1 // pred_check_branch
      %1846 = sbr.rel (0) target = $region45
    $region44: #{tpu_custom_call.1} parent=1 // pred_region
      %1848 = vsyncadd [#allocation7], 0
      %s1849 = sshll.u32 [#allocation6], 4
      %s1850 = int_to_ptr.vmem [resolvable:$true] %s1849
      %s1851 = sshll.u32 %s10, 4
      %s1852 = int_to_ptr.hbm [resolvable:$true] %s1851
      %1857 = dma.vmem_to_hbm [thread:$0]  %s1850, 256, %s1852, [#allocation7], 128, 128, 8
    $region45: #{tpu_custom_call.1} parent=1 // pred_fallthru
      _
    // Predicated region
    $region46: #{tpu_custom_call.1} parent=1 // pred_check
      _
    $region47: #{tpu_custom_call.1} parent=1 // pred_check_branch
      %1859 = sbr.rel (0) target = $region49
    $region48: #{tpu_custom_call.1} parent=1 // pred_region
      %1861 = dma.done [#allocation7], 256
    $region49: #{tpu_custom_call.1} parent=1 // pred_fallthru
      _
    %1862 = vsyncpa [#allocation7], 1

</llo_original>
